<compile_context>
chip_gen: v7x
topology: tpu7x:2x2x1
jax: 0.10.0
libtpu: 0.0.40
codegen_flags: <defaults>
</compile_context>

<pallas_src>
import functools

import jax
import jax.numpy as jnp
from jax.experimental import pallas as pl
from jax.experimental.pallas import tpu as pltpu


def _round_up(x, m):
    return ((x + m - 1) // m) * m


# ----------------------------- Pallas kernel --------------------------------
def effnet_gradcam_kernel(patches_ref, w1_ref, b1_ref, w2_ref, b2_ref,
                          wh_ref, bh_ref, out_ref, acc_ref, *, hw_true, tile_r):
    # patches_ref: (tile_r, K_pad)   bf16 im2col tile for the current (batch, row-tile)
    # w1_ref:      (K_pad, C_stem)   bf16 stem conv weight (BN folded), resident
    # w2_ref:      (C_stem, 1280)    bf16 1x1 head conv weight (BN folded), resident
    # wh_ref:      (1280, NC_pad)    bf16 classifier[1] Linear weight (transposed), resident
    # out_ref:     (1, NC_pad)       f32 logits for the current batch element
    # acc_ref:     (1, 1280)         f32 running pooled-sum accumulator (scratch)
    r = pl.program_id(1)

    @pl.when(r == 0)
    def _init():
        acc_ref[...] = jnp.zeros_like(acc_ref)

    p = patches_ref[...]                                        # (tile_r, K_pad) bf16

    # stem conv (as matmul) + SiLU  (SiLU kept in f32 — v5e has no bf16 VPU/EUP)
    h1 = jnp.dot(p, w1_ref[...], preferred_element_type=jnp.float32) + b1_ref[...]
    h1 = h1 * jax.nn.sigmoid(h1)

    # 1x1 conv to 1280 channels + SiLU
    h2 = jnp.dot(h1.astype(jnp.bfloat16), w2_ref[...],
                 preferred_element_type=jnp.float32) + b2_ref[...]
    h2 = h2 * jax.nn.sigmoid(h2)                                # (tile_r, 1280) f32

    # mask padded rows (only emitted when Ho*Wo is not a multiple of tile_r)
    if hw_true % tile_r != 0:
        row_ids = r * tile_r + jax.lax.broadcasted_iota(jnp.int32, (tile_r, 1), 0)
        h2 = jnp.where(row_ids < hw_true, h2, 0.0)

    # running global-average-pool sum for this batch element
    acc_ref[...] += jnp.sum(h2, axis=0, keepdims=True)

    @pl.when(r == pl.num_programs(1) - 1)
    def _finalize():
        pooled = acc_ref[...] * (1.0 / float(hw_true))          # (1, 1280) f32, true mean
        # classifier[0] = nn.Dropout -> identity in eval mode
        # classifier[1] = nn.Linear(1280, n_classes)
        logits = jnp.dot(pooled.astype(jnp.bfloat16), wh_ref[...],
                         preferred_element_type=jnp.float32) + bh_ref[...]
        out_ref[...] = logits.astype(out_ref.dtype)


# ------------------------------- wrapper -------------------------------------
def efficientnet_gradcam_forward(x_nchw, params, *, tile_r=None):
    """x_nchw: (N, Cin, H, W) float32. Returns logits (N, n_classes) float32."""
    w1, b1, w2, b2, wh, bh = params
    n, cin, h, w = x_nchw.shape
    ho, wo = h // 2, w // 2                       # 3x3 stride-2, pad 1
    hw = ho * wo
    k = 9 * cin
    c_stem = w1.shape[1]
    c_feat = w2.shape[1]
    n_classes = wh.shape[1]

    # lane-dense padding of the contraction / output dims
    k_pad = _round_up(k, 32)
    nc_pad = _round_up(n_classes, 128)

    # Row-tile sizing: ~1024 is the v7x sweet spot (64 MiB VMEM); v5e/v6e can go 2-4x.
    if tile_r is None:
        tile_r = min(1024, _round_up(hw, 16))
    tile_r = max(16, _round_up(tile_r, 16))
    r_tiles = pl.cdiv(hw, tile_r)
    r_pad = r_tiles * tile_r

    # --- glue: NCHW -> NHWC + im2col for the stride-2 3x3 stem conv (bf16) ---
    x = jnp.transpose(x_nchw, (0, 2, 3, 1)).astype(jnp.bfloat16)
    xp = jnp.pad(x, ((0, 0), (1, 1), (1, 1), (0, 0)))
    taps = [xp[:, kh:kh + 2 * ho:2, kw:kw + 2 * wo:2, :]        # (N, Ho, Wo, Cin)
            for kh in range(3) for kw in range(3)]
    patches = jnp.concatenate(taps, axis=-1).reshape(n, hw, k)
    patches = jnp.pad(patches, ((0, 0), (0, r_pad - hw), (0, k_pad - k)))

    # pad + cast weights (bf16 matmul operands, f32 biases)
    w1p = jnp.pad(w1, ((0, k_pad - k), (0, 0))).astype(jnp.bfloat16)
    b1p = b1.reshape(1, c_stem).astype(jnp.float32)
    w2p = w2.astype(jnp.bfloat16)
    b2p = b2.reshape(1, c_feat).astype(jnp.float32)
    whp = jnp.pad(wh, ((0, 0), (0, nc_pad - n_classes))).astype(jnp.bfloat16)
    bhp = jnp.pad(bh.reshape(1, n_classes),
                  ((0, 0), (0, nc_pad - n_classes))).astype(jnp.float32)

    kernel = functools.partial(effnet_gradcam_kernel, hw_true=hw, tile_r=tile_r)
    const2 = lambda i, r: (0, 0)

    out_padded = pl.pallas_call(
        kernel,
        out_shape=jax.ShapeDtypeStruct((n, 1, nc_pad), jnp.float32),
        grid_spec=pltpu.PrefetchScalarGridSpec(
            num_scalar_prefetch=0,
            grid=(n, r_tiles),
            in_specs=[
                # patches: tiled over (batch, row-tile); batch dim squeezed
                pl.BlockSpec((None, tile_r, k_pad), lambda i, r: (i, r, 0)),
                # weights / biases: constant index maps -> DMA'd once, resident in VMEM
                pl.BlockSpec((k_pad, c_stem), const2),
                pl.BlockSpec((1, c_stem), const2),
                pl.BlockSpec((c_stem, c_feat), const2),
                pl.BlockSpec((1, c_feat), const2),
                pl.BlockSpec((c_feat, nc_pad), const2),
                pl.BlockSpec((1, nc_pad), const2),
            ],
            out_specs=pl.BlockSpec((None, 1, nc_pad), lambda i, r: (i, 0, 0)),
            scratch_shapes=[pltpu.VMEM((1, c_feat), jnp.float32)],
        ),
        compiler_params=pltpu.CompilerParams(
            dimension_semantics=("parallel", "arbitrary"),
            vmem_limit_bytes=48 * 1024 * 1024,
        ),
    )(patches, w1p, b1p, w2p, b2p, whp, bhp)

    return out_padded.reshape(n, nc_pad)[:, :n_classes]


# ------------------------- pure-JAX reference (check) ------------------------
def reference_forward(x_nchw, params):
    w1, b1, w2, b2, wh, bh = params
    n, cin, h, w = x_nchw.shape
    ho, wo = h // 2, w // 2
    x = jnp.transpose(x_nchw, (0, 2, 3, 1)).astype(jnp.bfloat16)
    xp = jnp.pad(x, ((0, 0), (1, 1), (1, 1), (0, 0)))
    taps = [xp[:, kh:kh + 2 * ho:2, kw:kw + 2 * wo:2, :]
            for kh in range(3) for kw in range(3)]
    patches = jnp.concatenate(taps, axis=-1).reshape(n, ho * wo, 9 * cin)
    h1 = jnp.einsum('nrk,kc->nrc', patches, w1.astype(jnp.bfloat16),
                    preferred_element_type=jnp.float32) + b1
    h1 = h1 * jax.nn.sigmoid(h1)
    h2 = jnp.einsum('nrc,cf->nrf', h1.astype(jnp.bfloat16), w2.astype(jnp.bfloat16),
                    preferred_element_type=jnp.float32) + b2
    h2 = h2 * jax.nn.sigmoid(h2)
    pooled = jnp.mean(h2, axis=1)                       # avgpool (f32)
    logits = jnp.dot(pooled.astype(jnp.bfloat16), wh.astype(jnp.bfloat16),
                     preferred_element_type=jnp.float32) + bh
    return logits


def init_params(key, cin=3, c_stem=32, c_feat=1280, n_classes=10):
    ks = jax.random.split(key, 6)
    w1 = jax.random.normal(ks[0], (9 * cin, c_stem), jnp.float32) * 0.1
    b1 = jax.random.normal(ks[1], (1, c_stem), jnp.float32) * 0.01
    w2 = jax.random.normal(ks[2], (c_stem, c_feat), jnp.float32) * 0.05
    b2 = jax.random.normal(ks[3], (1, c_feat), jnp.float32) * 0.01
    wh = jax.random.normal(ks[4], (c_feat, n_classes), jnp.float32) * 0.02
    bh = jax.random.normal(ks[5], (1, n_classes), jnp.float32) * 0.01
    return (w1, b1, w2, b2, wh, bh)


if __name__ == "__main__":
    key = jax.random.PRNGKey(0)
    k_x, k_p = jax.random.split(key)

    N, CIN, H, W = 2, 3, 16, 16
    N_CLASSES = 10

    x = jax.random.normal(k_x, (N, CIN, H, W), jnp.float32)
    params = init_params(k_p, cin=CIN, n_classes=N_CLASSES)

    # tile_r=48 on the 8x8 post-stem grid (64 rows) exercises the multi-tile
    # accumulator path and the padded-row masking.
    logits = efficientnet_gradcam_forward(x, params, tile_r=48)
    jax.block_until_ready(logits)
    assert logits.shape == (N, N_CLASSES) and logits.dtype == jnp.float32

    ref = reference_forward(x, params)
    jax.block_until_ready(ref)
    assert jnp.allclose(logits, ref, atol=2e-2, rtol=2e-2), (
        f"mismatch: max abs err {jnp.max(jnp.abs(logits - ref))}")

    print("KERNEL_OK")
</pallas_src>

<mosaic_0001>
module attributes {stable_mosaic.version = 11 : i64} {
  func.func @effnet_gradcam_kernel(%arg0: i32, %arg1: i32, %arg2: memref<1x48x32xbf16, #tpu.memory_space<vmem>>, %arg3: memref<32x32xbf16, #tpu.memory_space<vmem>>, %arg4: memref<1x32xf32, #tpu.memory_space<vmem>>, %arg5: memref<32x1280xbf16, #tpu.memory_space<vmem>>, %arg6: memref<1x1280xf32, #tpu.memory_space<vmem>>, %arg7: memref<1280x128xbf16, #tpu.memory_space<vmem>>, %arg8: memref<1x128xf32, #tpu.memory_space<vmem>>, %arg9: memref<1x1x128xf32, #tpu.memory_space<vmem>>, %arg10: memref<1x1280xf32, #tpu.memory_space<vmem>>) attributes {dimension_semantics = [#tpu.dimension_semantics<parallel>, #tpu.dimension_semantics<arbitrary>], iteration_bounds = array<i64: 2, 2>, scalar_prefetch = 0 : i64, scratch_operands = 1 : i64, tpu.core_type = #tpu.core_type<tc>, window_params = [{transform_indices = @transform_0, window_bounds = array<i64: 1, 48, 32>}, {pipeline_mode = #tpu.pipeline_mode<synchronous>, transform_indices = @transform_1, window_bounds = array<i64: 32, 32>}, {pipeline_mode = #tpu.pipeline_mode<synchronous>, transform_indices = @transform_2, window_bounds = array<i64: 1, 32>}, {pipeline_mode = #tpu.pipeline_mode<synchronous>, transform_indices = @transform_3, window_bounds = array<i64: 32, 1280>}, {pipeline_mode = #tpu.pipeline_mode<synchronous>, transform_indices = @transform_4, window_bounds = array<i64: 1, 1280>}, {pipeline_mode = #tpu.pipeline_mode<synchronous>, transform_indices = @transform_5, window_bounds = array<i64: 1280, 128>}, {pipeline_mode = #tpu.pipeline_mode<synchronous>, transform_indices = @transform_6, window_bounds = array<i64: 1, 128>}, {transform_indices = @transform_7, window_bounds = array<i64: 1, 1, 128>}]} {
    %c0_i32 = arith.constant 0 : i32
    %0 = arith.cmpi eq, %arg1, %c0_i32 : i32
    %1 = arith.extui %0 : i1 to i32
    %c0_i32_0 = arith.constant 0 : i32
    %2 = arith.cmpi ne, %1, %c0_i32_0 : i32
    scf.if %2 {
      %cst_21 = arith.constant 0.000000e+00 : f32
      %46 = vector.broadcast %cst_21 : f32 to vector<1x1280xf32>
      %c0_22 = arith.constant 0 : index
      %c0_23 = arith.constant 0 : index
      %47 = vector.load %arg10[%c0_22, %c0_23] : memref<1x1280xf32, #tpu.memory_space<vmem>>, vector<1x1280xf32>
      tpu.vector_store %arg10[%c0_22, %c0_23], %46 {strides = array<i32>} : memref<1x1280xf32, #tpu.memory_space<vmem>>, vector<1x1280xf32>,
    } else {
    }
    %c0 = arith.constant 0 : index
    %c0_1 = arith.constant 0 : index
    %c0_2 = arith.constant 0 : index
    %3 = vector.load %arg2[%c0, %c0_1, %c0_2] : memref<1x48x32xbf16, #tpu.memory_space<vmem>>, vector<1x48x32xbf16>
    %4 = vector.shape_cast %3 : vector<1x48x32xbf16> to vector<48x32xbf16>
    %c0_3 = arith.constant 0 : index
    %c0_4 = arith.constant 0 : index
    %5 = vector.load %arg3[%c0_3, %c0_4] : memref<32x32xbf16, #tpu.memory_space<vmem>>, vector<32x32xbf16>
    %cst = arith.constant dense<0.000000e+00> : vector<48x32xf32>
    %6 = tpu.matmul %4, %5, %cst {dimension_numbers = #tpu.dot_dimension_numbers<[1], [0], [0], [1], [0, 0, 1, 1], [], []>} : vector<48x32xbf16>, vector<32x32xbf16>, vector<48x32xf32> -> vector<48x32xf32>
    %c0_5 = arith.constant 0 : index
    %c0_6 = arith.constant 0 : index
    %7 = vector.load %arg4[%c0_5, %c0_6] : memref<1x32xf32, #tpu.memory_space<vmem>>, vector<1x32xf32>
    %8 = vector.broadcast %7 : vector<1x32xf32> to vector<48x32xf32>
    %9 = arith.addf %6, %8 : vector<48x32xf32>
    %10 = arith.negf %9 : vector<48x32xf32>
    %11 = math.exp %10 : vector<48x32xf32>
    %cst_7 = arith.constant 1.000000e+00 : f32
    %12 = vector.broadcast %cst_7 : f32 to vector<48x32xf32>
    %13 = arith.addf %12, %11 : vector<48x32xf32>
    %14 = arith.divf %12, %13 : vector<48x32xf32>
    %15 = arith.mulf %9, %14 : vector<48x32xf32>
    %16 = arith.truncf %15 : vector<48x32xf32> to vector<48x32xbf16>
    %c0_8 = arith.constant 0 : index
    %c0_9 = arith.constant 0 : index
    %17 = vector.load %arg5[%c0_8, %c0_9] : memref<32x1280xbf16, #tpu.memory_space<vmem>>, vector<32x1280xbf16>
    %cst_10 = arith.constant dense<0.000000e+00> : vector<48x1280xf32>
    %18 = tpu.matmul %16, %17, %cst_10 {dimension_numbers = #tpu.dot_dimension_numbers<[1], [0], [0], [1], [0, 0, 1, 1], [], []>} : vector<48x32xbf16>, vector<32x1280xbf16>, vector<48x1280xf32> -> vector<48x1280xf32>
    %c0_11 = arith.constant 0 : index
    %c0_12 = arith.constant 0 : index
    %19 = vector.load %arg6[%c0_11, %c0_12] : memref<1x1280xf32, #tpu.memory_space<vmem>>, vector<1x1280xf32>
    %20 = vector.broadcast %19 : vector<1x1280xf32> to vector<48x1280xf32>
    %21 = arith.addf %18, %20 : vector<48x1280xf32>
    %22 = arith.negf %21 : vector<48x1280xf32>
    %23 = math.exp %22 : vector<48x1280xf32>
    %cst_13 = arith.constant 1.000000e+00 : f32
    %24 = vector.broadcast %cst_13 : f32 to vector<48x1280xf32>
    %25 = arith.addf %24, %23 : vector<48x1280xf32>
    %26 = arith.divf %24, %25 : vector<48x1280xf32>
    %27 = arith.mulf %21, %26 : vector<48x1280xf32>
    %c48_i32 = arith.constant 48 : i32
    %28 = arith.muli %arg1, %c48_i32 : i32
    %29 = tpu.iota {dimensions = array<i32: 0>} : vector<48x1xi32>
    %30 = vector.broadcast %28 : i32 to vector<48x1xi32>
    %31 = arith.addi %30, %29 : vector<48x1xi32>
    %c64_i32 = arith.constant 64 : i32
    %32 = vector.broadcast %c64_i32 : i32 to vector<48x1xi32>
    %33 = arith.cmpi slt, %31, %32 : vector<48x1xi32>
    %cst_14 = arith.constant 0.000000e+00 : f32
    %34 = vector.shape_cast %33 : vector<48x1xi1> to vector<48x1xi1>
    %35 = vector.broadcast %34 : vector<48x1xi1> to vector<48x1280xi1>
    %36 = vector.broadcast %cst_14 : f32 to vector<48x1280xf32>
    %37 = arith.select %35, %27, %36 : vector<48x1280xi1>, vector<48x1280xf32>
    %c0_15 = arith.constant 0 : index
    %c0_16 = arith.constant 0 : index
    %38 = vector.load %arg10[%c0_15, %c0_16] : memref<1x1280xf32, #tpu.memory_space<vmem>>, vector<1x1280xf32>
    %cst_17 = arith.constant dense<0.000000e+00> : vector<1280xf32>
    %39 = vector.multi_reduction <add>, %37, %cst_17 [0] : vector<48x1280xf32> to vector<1280xf32>
    %40 = vector.shape_cast %39 : vector<1280xf32> to vector<1x1280xf32>
    %41 = arith.addf %38, %40 : vector<1x1280xf32>
    %c0_18 = arith.constant 0 : index
    %c0_19 = arith.constant 0 : index
    %42 = vector.load %arg10[%c0_18, %c0_19] : memref<1x1280xf32, #tpu.memory_space<vmem>>, vector<1x1280xf32>
    tpu.vector_store %arg10[%c0_18, %c0_19], %41 {strides = array<i32>} : memref<1x1280xf32, #tpu.memory_space<vmem>>, vector<1x1280xf32>,
    %c1_i32 = arith.constant 1 : i32
    %43 = arith.cmpi eq, %arg1, %c1_i32 : i32
    %44 = arith.extui %43 : i1 to i32
    %c0_i32_20 = arith.constant 0 : i32
    %45 = arith.cmpi ne, %44, %c0_i32_20 : i32
    scf.if %45 {
      %c0_21 = arith.constant 0 : index
      %c0_22 = arith.constant 0 : index
      %46 = vector.load %arg10[%c0_21, %c0_22] : memref<1x1280xf32, #tpu.memory_space<vmem>>, vector<1x1280xf32>
      %cst_23 = arith.constant 1.562500e-02 : f32
      %47 = vector.broadcast %cst_23 : f32 to vector<1x1280xf32>
      %48 = arith.mulf %46, %47 : vector<1x1280xf32>
      %49 = arith.truncf %48 : vector<1x1280xf32> to vector<1x1280xbf16>
      %c0_24 = arith.constant 0 : index
      %c0_25 = arith.constant 0 : index
      %50 = vector.load %arg7[%c0_24, %c0_25] : memref<1280x128xbf16, #tpu.memory_space<vmem>>, vector<1280x128xbf16>
      %cst_26 = arith.constant dense<0.000000e+00> : vector<1x128xf32>
      %51 = tpu.matmul %49, %50, %cst_26 {dimension_numbers = #tpu.dot_dimension_numbers<[1], [0], [0], [1], [0, 0, 1, 1], [], []>} : vector<1x1280xbf16>, vector<1280x128xbf16>, vector<1x128xf32> -> vector<1x128xf32>
      %c0_27 = arith.constant 0 : index
      %c0_28 = arith.constant 0 : index
      %52 = vector.load %arg8[%c0_27, %c0_28] : memref<1x128xf32, #tpu.memory_space<vmem>>, vector<1x128xf32>
      %53 = arith.addf %51, %52 : vector<1x128xf32>
      %c0_29 = arith.constant 0 : index
      %c0_30 = arith.constant 0 : index
      %c0_31 = arith.constant 0 : index
      %54 = vector.load %arg9[%c0_29, %c0_30, %c0_31] : memref<1x1x128xf32, #tpu.memory_space<vmem>>, vector<1x1x128xf32>
      %55 = vector.shape_cast %54 : vector<1x1x128xf32> to vector<1x128xf32>
      %56 = vector.shape_cast %53 : vector<1x128xf32> to vector<1x1x128xf32>
      tpu.vector_store %arg9[%c0_29, %c0_30, %c0_31], %56 {strides = array<i32>} : memref<1x1x128xf32, #tpu.memory_space<vmem>>, vector<1x1x128xf32>,
    } else {
    }
    return
  }
  func.func @transform_0(%arg0: i32, %arg1: i32) -> (i32, i32, i32) {
    %c0_i32 = arith.constant 0 : i32
    %c0_i32_0 = arith.constant 0 : i32
    return %arg0, %arg1, %c0_i32 : i32, i32, i32
  }
  func.func @transform_1(%arg0: i32, %arg1: i32) -> (i32, i32) {
    %c0_i32 = arith.constant 0 : i32
    %c0_i32_0 = arith.constant 0 : i32
    %c0_i32_1 = arith.constant 0 : i32
    return %c0_i32, %c0_i32_0 : i32, i32
  }
  func.func @transform_2(%arg0: i32, %arg1: i32) -> (i32, i32) {
    %c0_i32 = arith.constant 0 : i32
    %c0_i32_0 = arith.constant 0 : i32
    %c0_i32_1 = arith.constant 0 : i32
    return %c0_i32, %c0_i32_0 : i32, i32
  }
  func.func @transform_3(%arg0: i32, %arg1: i32) -> (i32, i32) {
    %c0_i32 = arith.constant 0 : i32
    %c0_i32_0 = arith.constant 0 : i32
    %c0_i32_1 = arith.constant 0 : i32
    return %c0_i32, %c0_i32_0 : i32, i32
  }
  func.func @transform_4(%arg0: i32, %arg1: i32) -> (i32, i32) {
    %c0_i32 = arith.constant 0 : i32
    %c0_i32_0 = arith.constant 0 : i32
    %c0_i32_1 = arith.constant 0 : i32
    return %c0_i32, %c0_i32_0 : i32, i32
  }
  func.func @transform_5(%arg0: i32, %arg1: i32) -> (i32, i32) {
    %c0_i32 = arith.constant 0 : i32
    %c0_i32_0 = arith.constant 0 : i32
    %c0_i32_1 = arith.constant 0 : i32
    return %c0_i32, %c0_i32_0 : i32, i32
  }
  func.func @transform_6(%arg0: i32, %arg1: i32) -> (i32, i32) {
    %c0_i32 = arith.constant 0 : i32
    %c0_i32_0 = arith.constant 0 : i32
    %c0_i32_1 = arith.constant 0 : i32
    return %c0_i32, %c0_i32_0 : i32, i32
  }
  func.func @transform_7(%arg0: i32, %arg1: i32) -> (i32, i32, i32) {
    %c0_i32 = arith.constant 0 : i32
    %c0_i32_0 = arith.constant 0 : i32
    %c0_i32_1 = arith.constant 0 : i32
    return %arg0, %c0_i32, %c0_i32_0 : i32, i32, i32
  }
}

</mosaic_0001>

<llo_original>
// kernel: tpu_custom_call.1
$region0: #{tpu_custom_call.1}
  #allocation0 [shape = 'u32[]', space=smem, size = 0x4, offset = 0x4, fixed_abs, tag = 'smem constant byte address 0x4 - core index']
  #allocation1 [shape = 'u32[144,128]{1,0:T(1,128)}', space=vmem, size = 0x12000, scoped, tag = 'internal scratch']
  #allocation2 [shape = 'f32[1,1280]{1,0:T(1,128)}', space=vmem, size = 0x1400, scoped, tag = 'scratch operand']
  %s0 = inlined_call_operand.vmem [shape: bf16[2,96,32], index: 0, kind: input, shape index: {}]
  %s1 = inlined_call_operand.vmem [shape: bf16[32,32], index: 1, kind: input, shape index: {}]
  %s2 = inlined_call_operand.vmem [shape: f32[1,32], index: 2, kind: input, shape index: {}]
  %s3 = inlined_call_operand.hbm [shape: bf16[32,1280], index: 3, kind: input, shape index: {}]
  %s4 = inlined_call_operand.vmem [shape: f32[1,1280], index: 4, kind: input, shape index: {}]
  %s5 = inlined_call_operand.hbm [shape: bf16[1280,128], index: 5, kind: input, shape index: {}]
  %s6 = inlined_call_operand.vmem [shape: f32[1,128], index: 6, kind: input, shape index: {}]
  %s7 = inlined_call_operand.hbm [shape: f32[2,1,128], index: 7, kind: output, shape index: {}]
  %s8 = sld [smem:[#allocation0]]
  $region77: #{tpu_custom_call.1} parent=0
    _
  %s10 = ssub.s32 1, %s8
  %s11 = scalar_select 0, %s10, %s8
  $region1: #{tpu_custom_call.1} parent=0
    #allocation3 [shape = 'u8[81920]{0}', space=vmem, size = 0x14000, scoped, tag = 'input window, operand 3, single buffered']
    #allocation4 [shape = 's32[2]{0}', space=sflag, size = 0x8, scoped, tag = 'scoped memory for tpu_custom_call.1']
    #allocation5 [shape = 's32[2]{0}', space=sflag, size = 0x8, scoped, tag = 'scoped memory for tpu_custom_call.1']
    #allocation6 [shape = 'u8[327680]{0}', space=vmem, size = 0x50000, scoped, tag = 'input window, operand 5, single buffered']
    #allocation7 [shape = 's32[1]{0}', space=sflag, size = 0x4, scoped, tag = 'scoped memory for tpu_custom_call.1']
    #allocation8 [shape = 'u8[1024]{0}', space=vmem, size = 0x400, scoped, tag = 'output window, operand 0']
    %12 = vsyncpa [#allocation4], 0
    %13 = vsyncpa [#allocation7], 0
    %14 = vsyncpa [#allocation5], 0
    %s15 = scalar_lea.sflag [#allocation5], 1
    %16 = vsyncpa %s15, 0
    loop: start=0, step=1, limit=6
    $region2: #{tpu_custom_call.1} parent=1 // loop_pre_header
      _
    $region3: #{tpu_custom_call.1} parent=1 // loop_header
      %s18 = sphi 0, %s22
      %p19 = scmp.ge.s32.totalorder %s18, 6
      %s25 = sphi 0, %s37
      %s26 = sphi 0, %s33
      %s27 = sphi 0, %s25
      %s28 = sphi 0, %s26
      %s29 = sphi 0, %s27
      %s30 = sphi 0, %s28
      %s42 = sphi 0, %s44
      %s45 = sphi 0, %s42
      %s46 = sphi 0, %s45
      %s62 = sphi 0, %s46
      %s66 = sphi 0, %s66
      %s68 = sphi 0, %s66
      %s69 = sphi 0, %s68
      %s83 = sphi 0, %s69
      %s87 = sphi 0, %s87
      %s89 = sphi 0, %s87
      %s90 = sphi 0, %s89
      %s104 = sphi 0, %s90
      %s108 = sphi 0, %s108
      %s110 = sphi 0, %s108
      %s111 = sphi 0, %s110
      %s125 = sphi 0, %s111
      %s129 = sphi 0, %s129
      %s131 = sphi 0, %s129
      %s132 = sphi 0, %s131
      %s146 = sphi 0, %s132
      %s150 = sphi 0, %s150
      %s152 = sphi 0, %s150
      %s153 = sphi 0, %s152
      %s167 = sphi 0, %s153
      %s171 = sphi 0, %s171
      %s173 = sphi 0, %s171
      %s174 = sphi 0, %s173
      %s188 = sphi 0, %s174
      %s194 = sphi 0, %s196
      %s197 = sphi 0, %s194
      %s198 = sphi 0, %s197
      %s214 = sphi 0, %s198
    $region4: #{tpu_custom_call.1} parent=1 // loop_header_branch
      %21 = sbr.rel (%p19) target = $region8
    $region5: #{tpu_custom_call.1} parent=1 // loop_body
      %s23 = ssub.s32 %s18, 1
      %s24 = ssub.s32 %s18, 2
      %s31 = sadd.s32 1, %s26
      %p32 = scmp.ge.s32.totalorder %s31, 2
      %s33 = scalar_select %p32, 0, %s31
      %s34 = sadd.s32 1, %s25
      %s35 = scalar_select %p32, %s34, %s25
      %p36 = scmp.ge.s32.totalorder %s35, 2
      %s37 = scalar_select %p36, 0, %s35
      %s38 = ssub.s32 %s25, %s37
      %s39 = ssub.s32 %s26, %s33
      %s40 = sor.u32 %s38, %s39
      %p41 = scmp.eq.s32.totalorder %s40, 0
      %s43 = sadd.s32 %s42, 1
      %s44 = scalar_select %p41, %s42, %s43
      %p47 = pneg %p41
      %p48 = scmp.eq.s32.totalorder %s18, 3
      %p49 = por %p47, %p48
      %p50 = scmp.ne.s32.totalorder %s42, %s45
      %p51 = scmp.eq.s32.totalorder %s18, 0
      %p52 = por %p50, %p51
      %p53 = scmp.ne.s32.totalorder %s42, %s45
      %p54 = scmp.eq.s32.totalorder %s23, 3
      %p55 = por %p53, %p54
      %p56 = scmp.ne.s32.totalorder %s45, %s46
      %p57 = scmp.eq.s32.totalorder %s23, 0
      %p58 = por %p56, %p57
      %p59 = scmp.ne.s32.totalorder %s45, %s46
      %p60 = scmp.eq.s32.totalorder %s24, 3
      %p61 = por %p59, %p60
      %p63 = scmp.ne.s32.totalorder %s46, %s62
      %p64 = scmp.eq.s32.totalorder %s24, 0
      %p65 = por %p63, %p64
      %s67 = sadd.s32 %s66, 1
      %p70 = scmp.eq.s32.totalorder %s18, 3
      %p71 = scmp.ne.s32.totalorder %s66, %s68
      %p72 = scmp.eq.s32.totalorder %s18, 0
      %p73 = por %p71, %p72
      %p74 = scmp.ne.s32.totalorder %s66, %s68
      %p75 = scmp.eq.s32.totalorder %s23, 3
      %p76 = por %p74, %p75
      %p77 = scmp.ne.s32.totalorder %s68, %s69
      %p78 = scmp.eq.s32.totalorder %s23, 0
      %p79 = por %p77, %p78
      %p80 = scmp.ne.s32.totalorder %s68, %s69
      %p81 = scmp.eq.s32.totalorder %s24, 3
      %p82 = por %p80, %p81
      %p84 = scmp.ne.s32.totalorder %s69, %s83
      %p85 = scmp.eq.s32.totalorder %s24, 0
      %p86 = por %p84, %p85
      %s88 = sadd.s32 %s87, 1
      %p91 = scmp.eq.s32.totalorder %s18, 3
      %p92 = scmp.ne.s32.totalorder %s87, %s89
      %p93 = scmp.eq.s32.totalorder %s18, 0
      %p94 = por %p92, %p93
      %p95 = scmp.ne.s32.totalorder %s87, %s89
      %p96 = scmp.eq.s32.totalorder %s23, 3
      %p97 = por %p95, %p96
      %p98 = scmp.ne.s32.totalorder %s89, %s90
      %p99 = scmp.eq.s32.totalorder %s23, 0
      %p100 = por %p98, %p99
      %p101 = scmp.ne.s32.totalorder %s89, %s90
      %p102 = scmp.eq.s32.totalorder %s24, 3
      %p103 = por %p101, %p102
      %p105 = scmp.ne.s32.totalorder %s90, %s104
      %p106 = scmp.eq.s32.totalorder %s24, 0
      %p107 = por %p105, %p106
      %s109 = sadd.s32 %s108, 1
      %p112 = scmp.eq.s32.totalorder %s18, 3
      %p113 = scmp.ne.s32.totalorder %s108, %s110
      %p114 = scmp.eq.s32.totalorder %s18, 0
      %p115 = por %p113, %p114
      %p116 = scmp.ne.s32.totalorder %s108, %s110
      %p117 = scmp.eq.s32.totalorder %s23, 3
      %p118 = por %p116, %p117
      %p119 = scmp.ne.s32.totalorder %s110, %s111
      %p120 = scmp.eq.s32.totalorder %s23, 0
      %p121 = por %p119, %p120
      %p122 = scmp.ne.s32.totalorder %s110, %s111
      %p123 = scmp.eq.s32.totalorder %s24, 3
      %p124 = por %p122, %p123
      %p126 = scmp.ne.s32.totalorder %s111, %s125
      %p127 = scmp.eq.s32.totalorder %s24, 0
      %p128 = por %p126, %p127
      %s130 = sadd.s32 %s129, 1
      %p133 = scmp.eq.s32.totalorder %s18, 3
      %p134 = scmp.ne.s32.totalorder %s129, %s131
      %p135 = scmp.eq.s32.totalorder %s18, 0
      %p136 = por %p134, %p135
      %p137 = scmp.ne.s32.totalorder %s129, %s131
      %p138 = scmp.eq.s32.totalorder %s23, 3
      %p139 = por %p137, %p138
      %p140 = scmp.ne.s32.totalorder %s131, %s132
      %p141 = scmp.eq.s32.totalorder %s23, 0
      %p142 = por %p140, %p141
      %p143 = scmp.ne.s32.totalorder %s131, %s132
      %p144 = scmp.eq.s32.totalorder %s24, 3
      %p145 = por %p143, %p144
      %p147 = scmp.ne.s32.totalorder %s132, %s146
      %p148 = scmp.eq.s32.totalorder %s24, 0
      %p149 = por %p147, %p148
      %s151 = sadd.s32 %s150, 1
      %p154 = scmp.eq.s32.totalorder %s18, 3
      %p155 = scmp.ne.s32.totalorder %s150, %s152
      %p156 = scmp.eq.s32.totalorder %s18, 0
      %p157 = por %p155, %p156
      %p158 = scmp.ne.s32.totalorder %s150, %s152
      %p159 = scmp.eq.s32.totalorder %s23, 3
      %p160 = por %p158, %p159
      %p161 = scmp.ne.s32.totalorder %s152, %s153
      %p162 = scmp.eq.s32.totalorder %s23, 0
      %p163 = por %p161, %p162
      %p164 = scmp.ne.s32.totalorder %s152, %s153
      %p165 = scmp.eq.s32.totalorder %s24, 3
      %p166 = por %p164, %p165
      %p168 = scmp.ne.s32.totalorder %s153, %s167
      %p169 = scmp.eq.s32.totalorder %s24, 0
      %p170 = por %p168, %p169
      %s172 = sadd.s32 %s171, 1
      %p175 = scmp.eq.s32.totalorder %s18, 3
      %p176 = scmp.ne.s32.totalorder %s171, %s173
      %p177 = scmp.eq.s32.totalorder %s18, 0
      %p178 = por %p176, %p177
      %p179 = scmp.ne.s32.totalorder %s171, %s173
      %p180 = scmp.eq.s32.totalorder %s23, 3
      %p181 = por %p179, %p180
      %p182 = scmp.ne.s32.totalorder %s173, %s174
      %p183 = scmp.eq.s32.totalorder %s23, 0
      %p184 = por %p182, %p183
      %p185 = scmp.ne.s32.totalorder %s173, %s174
      %p186 = scmp.eq.s32.totalorder %s24, 3
      %p187 = por %p185, %p186
      %p189 = scmp.ne.s32.totalorder %s174, %s188
      %p190 = scmp.eq.s32.totalorder %s24, 0
      %p191 = por %p189, %p190
      %s192 = ssub.s32 %s25, %s37
      %p193 = scmp.eq.s32.totalorder %s192, 0
      %s195 = sadd.s32 %s194, 1
      %s196 = scalar_select %p193, %s194, %s195
      %p199 = pneg %p193
      %p200 = scmp.eq.s32.totalorder %s18, 3
      %p201 = por %p199, %p200
      %p202 = scmp.ne.s32.totalorder %s194, %s197
      %p203 = scmp.eq.s32.totalorder %s18, 0
      %p204 = por %p202, %p203
      %p205 = scmp.ne.s32.totalorder %s194, %s197
      %p206 = scmp.eq.s32.totalorder %s23, 3
      %p207 = por %p205, %p206
      %p208 = scmp.ne.s32.totalorder %s197, %s198
      %p209 = scmp.eq.s32.totalorder %s23, 0
      %p210 = por %p208, %p209
      %p211 = scmp.ne.s32.totalorder %s197, %s198
      %p212 = scmp.eq.s32.totalorder %s24, 3
      %p213 = por %p211, %p212
      %p215 = scmp.ne.s32.totalorder %s198, %s214
      %p216 = scmp.eq.s32.totalorder %s24, 0
      %p217 = por %p215, %p216
      %p218 = scmp.le.s32.totalorder 1, %s18
      %p219 = scmp.lt.s32.totalorder %s18, 5
      %p220 = pnand %p218, %p219
      %p221 = pneg %p220
      // Predicated region
      $region9: #{tpu_custom_call.1} parent=5 // pred_check
        _
      $region10: #{tpu_custom_call.1} parent=5 // pred_check_branch
        %223 = sbr.rel (%p220) target = $region12
      $region11: #{tpu_custom_call.1} parent=5 // pred_region
        %s224 = ssub.s32 %s18, 1
        // Predicated region
        $region13: #{tpu_custom_call.1} parent=11 // pred_check
          %p225 = pneg %p79
        $region14: #{tpu_custom_call.1} parent=11 // pred_check_branch
          %227 = sbr.rel (%p225) target = $region16
        $region15: #{tpu_custom_call.1} parent=11 // pred_region
          _
        $region16: #{tpu_custom_call.1} parent=11 // pred_fallthru
          _
        // Predicated region
        $region17: #{tpu_custom_call.1} parent=11 // pred_check
          %p228 = pneg %p100
        $region18: #{tpu_custom_call.1} parent=11 // pred_check_branch
          %230 = sbr.rel (%p228) target = $region20
        $region19: #{tpu_custom_call.1} parent=11 // pred_region
          _
        $region20: #{tpu_custom_call.1} parent=11 // pred_fallthru
          _
        // Predicated region
        $region21: #{tpu_custom_call.1} parent=11 // pred_check
          %p231 = pneg %p121
        $region22: #{tpu_custom_call.1} parent=11 // pred_check_branch
          %233 = sbr.rel (%p231) target = $region24
        $region23: #{tpu_custom_call.1} parent=11 // pred_region
          %s235 = ssub.s32 2560, 2560
          %236 = vsyncadd [#allocation4], %s235
          %s237 = sshll.u32 [#allocation3], 4
          %s238 = int_to_ptr.vmem [resolvable:$true] %s237
          %243 = dma.hbm_to_vmem [thread:$0]  %s3, 2560, %s238, [#allocation4], 640, 640, 40
        $region24: #{tpu_custom_call.1} parent=11 // pred_fallthru
          _
        // Predicated region
        $region25: #{tpu_custom_call.1} parent=11 // pred_check
          %p244 = pneg %p142
        $region26: #{tpu_custom_call.1} parent=11 // pred_check_branch
          %246 = sbr.rel (%p244) target = $region28
        $region27: #{tpu_custom_call.1} parent=11 // pred_region
          _
        $region28: #{tpu_custom_call.1} parent=11 // pred_fallthru
          _
        // Predicated region
        $region29: #{tpu_custom_call.1} parent=11 // pred_check
          %p247 = pneg %p163
        $region30: #{tpu_custom_call.1} parent=11 // pred_check_branch
          %249 = sbr.rel (%p247) target = $region32
        $region31: #{tpu_custom_call.1} parent=11 // pred_region
          %s251 = ssub.s32 10240, 10240
          %252 = vsyncadd [#allocation7], %s251
          %s253 = sshll.u32 [#allocation6], 4
          %s254 = int_to_ptr.vmem [resolvable:$true] %s253
          %259 = dma.hbm_to_vmem [thread:$0]  %s5, 10240, %s254, [#allocation7], 64, 64, 4
        $region32: #{tpu_custom_call.1} parent=11 // pred_fallthru
          _
        // Predicated region
        $region33: #{tpu_custom_call.1} parent=11 // pred_check
          %p260 = pneg %p184
        $region34: #{tpu_custom_call.1} parent=11 // pred_check_branch
          %262 = sbr.rel (%p260) target = $region36
        $region35: #{tpu_custom_call.1} parent=11 // pred_region
          _
        $region36: #{tpu_custom_call.1} parent=11 // pred_fallthru
          _
      $region12: #{tpu_custom_call.1} parent=5 // pred_fallthru
        _
      %p263 = scmp.lt.s32.totalorder %s18, 4
      // Predicated region
      $region37: #{tpu_custom_call.1} parent=5 // pred_check
        %p264 = pneg %p263
      $region38: #{tpu_custom_call.1} parent=5 // pred_check_branch
        %266 = sbr.rel (%p264) target = $region40
      $region39: #{tpu_custom_call.1} parent=5 // pred_region
        // Predicated region
        $region41: #{tpu_custom_call.1} parent=39 // pred_check
          %p267 = pneg %p52
        $region42: #{tpu_custom_call.1} parent=39 // pred_check_branch
          %269 = sbr.rel (%p267) target = $region44
        $region43: #{tpu_custom_call.1} parent=39 // pred_region
          %s270 = smul.u32 6, %s26
          %p271 = scmp.lt.s32.totalorder %s25, 1
          %s272 = scalar_select %p271, %s25, 1
          %p273 = scmp.lt.s32.totalorder %s270, 11
          %s274 = scalar_select %p273, %s270, 11
          %s275 = smul.addr %s272, 12
          %s276 = sadd.s32 %s274, %s275
          %s277 = smul.addr %s276, 4
          %s278 = scalar_lea.vmem %s0, %s277
          %s279 = smul.u32 6, %s26
        $region44: #{tpu_custom_call.1} parent=39 // pred_fallthru
          _
      $region40: #{tpu_custom_call.1} parent=5 // pred_fallthru
        _
      %p280 = scmp.le.s32.totalorder 1, %s18
      %p281 = scmp.lt.s32.totalorder %s18, 5
      %p282 = pnand %p280, %p281
      %p283 = pneg %p282
      // Predicated region
      $region45: #{tpu_custom_call.1} parent=5 // pred_check
        _
      $region46: #{tpu_custom_call.1} parent=5 // pred_check_branch
        %285 = sbr.rel (%p282) target = $region48
      $region47: #{tpu_custom_call.1} parent=5 // pred_region
        %s286 = ssub.s32 %s18, 1
        // Predicated region
        $region49: #{tpu_custom_call.1} parent=47 // pred_check
          %p287 = pneg %p121
        $region50: #{tpu_custom_call.1} parent=47 // pred_check_branch
          %289 = sbr.rel (%p287) target = $region52
        $region51: #{tpu_custom_call.1} parent=47 // pred_region
          %290 = dma.done [#allocation4], 2560
        $region52: #{tpu_custom_call.1} parent=47 // pred_fallthru
          _
        // Predicated region
        $region53: #{tpu_custom_call.1} parent=47 // pred_check
          %p291 = pneg %p163
        $region54: #{tpu_custom_call.1} parent=47 // pred_check_branch
          %293 = sbr.rel (%p291) target = $region56
        $region55: #{tpu_custom_call.1} parent=47 // pred_region
          %294 = dma.done [#allocation7], 10240
        $region56: #{tpu_custom_call.1} parent=47 // pred_fallthru
          _
        %s295 = smul.u32 6, %s28
        %p296 = scmp.lt.s32.totalorder %s27, 1
        %s297 = scalar_select %p296, %s27, 1
        %p298 = scmp.lt.s32.totalorder %s295, 11
        %s299 = scalar_select %p298, %s295, 11
        %s300 = smul.addr %s297, 12
        %s301 = sadd.s32 %s299, %s300
        %s302 = smul.addr %s301, 4
        %s303 = scalar_lea.vmem %s0, %s302
        %p304 = pneg %p58
        %p305 = pneg %p55
        %p306 = pneg %p79
        %p307 = pneg %p76
        %p308 = pneg %p100
        %p309 = pneg %p97
        %p310 = pneg %p121
        %p311 = pneg %p118
        %p312 = pneg %p142
        %p313 = pneg %p139
        %p314 = pneg %p163
        %p315 = pneg %p160
        %p316 = pneg %p184
        %p317 = pneg %p181
        %p318 = pneg %p210
        %p319 = pneg %p207
        %s320 = sand.u32 %s197, 1
        %s321 = scalar_lea.sflag [#allocation5], %s320
        %s322 = sand.u32 %s197, 1
        %s323 = scalar_lea.vmem [#allocation8], %s322
        %s324 = smul.u32 6, %s28
        %p325 = scmp.lt.s32.totalorder %s27, 1
        %s326 = scalar_select %p325, %s27, 1
        %p327 = scmp.lt.s32.totalorder %s324, 11
        %s328 = scalar_select %p327, %s324, 11
        %s329 = smul.addr %s326, 12
        %s330 = sadd.s32 %s328, %s329
        %s331 = smul.addr %s330, 4
        %s332 = scalar_lea.vmem %s0, %s331
        %s333 = smul.u32 6, %s28
        %p335 = scmp.eq.s32.totalorder %s28, 0
        // Predicated region
        $region57: #{tpu_custom_call.1} parent=47 // pred_check
          %p336 = pneg %p335
        $region58: #{tpu_custom_call.1} parent=47 // pred_check_branch
          %338 = sbr.rel (%p336) target = $region60
        $region59: #{tpu_custom_call.1} parent=47 // pred_region
          %339 = vst [vmem:[#allocation2] sm:$0xff] 0.0
          %v340 = vlaneseq
          %vm341 = vcmp.ge.s32.totalorder %v340, 0
          %vm342 = vcmp.lt.s32.totalorder %v340, 256
          %vm343 = vmand %vm341, %vm342
          %344 = vst.msk [vmem:[#allocation2 + $0x8] sm:$0x3] %vm343, 0.0
        $region60: #{tpu_custom_call.1} parent=47 // pred_fallthru
          _
        %v345 = vld [vmem:[%s332] sm:$0xf]
        %v346 = vld [vmem:[%s332 + $0x4] sm:$0xf]
        %v347 = vld [vmem:[%s332 + $0x8] sm:$0xf]
        %v348 = vld [vmem:[%s332 + $0xc] sm:$0xf]
        %v349 = vld [vmem:[%s332 + $0x10] sm:$0xf]
        %v350 = vld [vmem:[%s332 + $0x14] sm:$0xf]
        %v351 = vld [vmem:[%s1] sm:$0xf]
        %v352 = vld [vmem:[%s1 + $0x4] sm:$0xf]
        %v353 = vld [vmem:[%s1 + $0x8] sm:$0xf]
        %v354 = vld [vmem:[%s1 + $0xc] sm:$0xf]
        %v355 = vld [vmem:[%s2] sm:$0x1]
        %v357 = vlaneseq
        %v358 = vshrl.u32 %v357, 7
        %v359 = vsub.s32 0, %v358
        %v360 = vrot.slane %v355, %v359
        %v368 = vunpack.c.l.b16 %v345
        %v369 = vunpack.c.l.b16 %v346
        %v370 = vunpack.c.l.b16 %v347
        %v371 = vunpack.c.l.b16 %v348
        %v372 = vunpack.c.l.b16 %v349
        %v373 = vunpack.c.l.b16 %v350
        %v374 = vpack.c.b16 %v369, %v368
        %v375 = vpack.c.b16 %v371, %v370
        %v376 = vpack.c.b16 %v373, %v372
        %v381 = vunpack.c.l.b16 %v351
        %v382 = vunpack.c.l.b16 %v352
        %v383 = vunpack.c.l.b16 %v353
        %v384 = vunpack.c.l.b16 %v354
        %v385 = vpack.c.b16 %v382, %v381
        %v386 = vpack.c.b16 %v384, %v383
        %vm389 = vcmask 261120
        %v391 = vsel %vm389, %v374, 0
        %v394 = vsel %vm389, %v375, 0
        %v397 = vsel %vm389, %v376, 0
        %399 = vmatprep.subr.bf16.mxu0 0
        %400 = vmatpush1.bf16.msra.mxu0 %v385
        %401 = vmatprep.subr.bf16.mxu0 0
        %402 = vmatpush1.bf16.msra.mxu0 %v386
        %403 = vmatprep.subr.bf16.mxu0 0
        %404 = vmatpush1.bf16.msra.mxu0 0
        %405 = vmatprep.subr.bf16.mxu0 0
        %406 = vmatpush1.bf16.msra.mxu0 0
        %407 = vmatprep.subr.bf16.mxu0 0
        %408 = vmatpush1.bf16.msra.mxu0 0
        %409 = vmatprep.subr.bf16.mxu0 0
        %410 = vmatpush1.bf16.msra.mxu0 0
        %411 = vmatprep.subr.bf16.mxu0 0
        %412 = vmatpush1.bf16.msra.mxu0 0
        %413 = vmatprep.subr.bf16.mxu0 0
        %414 = vmatpush1.bf16.msra.mxu0 0
        %415 = vmatprep.subr.bf16.mxu0 0
        %416 = vmatpush1.bf16.msra.mxu0 0
        %417 = vmatprep.subr.bf16.mxu0 0
        %418 = vmatpush1.bf16.msra.mxu0 0
        %419 = vmatprep.subr.bf16.mxu0 0
        %420 = vmatpush1.bf16.msra.mxu0 0
        %421 = vmatprep.subr.bf16.mxu0 0
        %422 = vmatpush1.bf16.msra.mxu0 0
        %423 = vmatprep.subr.bf16.mxu0 0
        %424 = vmatpush1.bf16.msra.mxu0 0
        %425 = vmatprep.subr.bf16.mxu0 0
        %426 = vmatpush1.bf16.msra.mxu0 0
        %427 = vmatprep.subr.bf16.mxu0 0
        %428 = vmatpush1.bf16.msra.mxu0 0
        %429 = vmatprep.subr.bf16.mxu0 0
        %430 = vmatpush1.bf16.msra.mxu0 0
        %431 = vmatprep.mubr.bf16.mxu0 0
        %432 = vmatmul.mubr.bf16.gmra.mrb[0].mxu0 %v391
        %v433 = vpop.f32.mrb[0].mxu0
        %v434 = vadd.f32 %v360, %v433
        %v435 = vpop.f32.mrb[0].mxu0
        %v436 = vpop.f32.mrb[0].mxu0
        %v437 = vadd.f32 %v360, %v436
        %v438 = vpop.f32.mrb[0].mxu0
        %439 = vmatprep.mubr.bf16.mxu0 0
        %440 = vmatmul.mubr.bf16.gmra.mrb[0].mxu0 %v394
        %v441 = vpop.f32.mrb[0].mxu0
        %v442 = vadd.f32 %v360, %v441
        %v443 = vpop.f32.mrb[0].mxu0
        %v444 = vpop.f32.mrb[0].mxu0
        %v445 = vadd.f32 %v360, %v444
        %v446 = vpop.f32.mrb[0].mxu0
        %447 = vmatprep.mubr.bf16.mxu0 0
        %448 = vmatmul.mubr.bf16.gmra.mrb[0].mxu0 %v397
        %v449 = vpop.f32.mrb[0].mxu0
        %v450 = vadd.f32 %v360, %v449
        %v451 = vpop.f32.mrb[0].mxu0
        %v452 = vpop.f32.mrb[0].mxu0
        %v453 = vadd.f32 %v360, %v452
        %v454 = vpop.f32.mrb[0].mxu0
        %455 = vdwg.mxu0
        %v456 = vxor.u32 %v434, 2147483648
        %v457 = vxor.u32 %v437, 2147483648
        %v458 = vxor.u32 %v442, 2147483648
        %v459 = vxor.u32 %v445, 2147483648
        %v460 = vxor.u32 %v450, 2147483648
        %v461 = vxor.u32 %v453, 2147483648
        %v462 = vmul.f32 %v456, 1.442695
        %v463 = vpow.pop %v462
        %v464 = vmul.f32 %v457, 1.442695
        %v465 = vpow.pop %v464
        %v466 = vmul.f32 %v458, 1.442695
        %v467 = vpow.pop %v466
        %v468 = vmul.f32 %v459, 1.442695
        %v469 = vpow.pop %v468
        %v470 = vmul.f32 %v460, 1.442695
        %v471 = vpow.pop %v470
        %v472 = vmul.f32 %v461, 1.442695
        %v473 = vpow.pop %v472
        %v474 = vadd.f32 %v463, 1.0
        %v475 = vadd.f32 %v465, 1.0
        %v476 = vadd.f32 %v467, 1.0
        %v477 = vadd.f32 %v469, 1.0
        %v478 = vadd.f32 %v471, 1.0
        %v479 = vadd.f32 %v473, 1.0
        %v480 = vrcp.pop %v474
        %v481 = vmul.f32 1.0, %v480
        %v482 = vrcp.pop %v475
        %v483 = vmul.f32 1.0, %v482
        %v484 = vrcp.pop %v476
        %v485 = vmul.f32 1.0, %v484
        %v486 = vrcp.pop %v477
        %v487 = vmul.f32 1.0, %v486
        %v488 = vrcp.pop %v478
        %v489 = vmul.f32 1.0, %v488
        %v490 = vrcp.pop %v479
        %v491 = vmul.f32 1.0, %v490
        %v492 = vmul.f32 %v434, %v481
        %v493 = vmul.f32 %v437, %v483
        %v494 = vmul.f32 %v442, %v485
        %v495 = vmul.f32 %v445, %v487
        %v496 = vmul.f32 %v450, %v489
        %v497 = vmul.f32 %v453, %v491
        %v498 = vpack.c.bf16 %v493, %v492
        %v499 = vpack.c.bf16 %v495, %v494
        %v500 = vpack.c.bf16 %v497, %v496
        %v501 = vld [vmem:[#allocation3] sm:$0xff]
        %v502 = vld [vmem:[#allocation3 + $0x8] sm:$0xff]
        %v503 = vld [vmem:[#allocation3 + $0x10] sm:$0xff]
        %v504 = vld [vmem:[#allocation3 + $0x18] sm:$0xff]
        %v505 = vld [vmem:[#allocation3 + $0x20] sm:$0xff]
        %v506 = vld [vmem:[#allocation3 + $0x28] sm:$0xff]
        %v507 = vld [vmem:[#allocation3 + $0x30] sm:$0xff]
        %v508 = vld [vmem:[#allocation3 + $0x38] sm:$0xff]
        %v509 = vld [vmem:[#allocation3 + $0x40] sm:$0xff]
        %v510 = vld [vmem:[#allocation3 + $0x48] sm:$0xff]
        %v511 = vld [vmem:[#allocation3 + $0x50] sm:$0xff]
        %v512 = vld [vmem:[#allocation3 + $0x58] sm:$0xff]
        %v513 = vld [vmem:[#allocation3 + $0x60] sm:$0xff]
        %v514 = vld [vmem:[#allocation3 + $0x68] sm:$0xff]
        %v515 = vld [vmem:[#allocation3 + $0x70] sm:$0xff]
        %v516 = vld [vmem:[#allocation3 + $0x78] sm:$0xff]
        %v517 = vld [vmem:[#allocation3 + $0x80] sm:$0xff]
        %v518 = vld [vmem:[#allocation3 + $0x88] sm:$0xff]
        %v519 = vld [vmem:[#allocation3 + $0x90] sm:$0xff]
        %v520 = vld [vmem:[#allocation3 + $0x98] sm:$0xff]
        %v521 = vld [vmem:[%s4] sm:$0xff]
        %v522 = vld [vmem:[%s4 + $0x8] sm:$0x3]
        %v525 = vlaneseq
        %v526 = vshrl.u32 %v525, 7
        %v527 = vsub.s32 0, %v526
        %v528 = vrot.slane %v521, %v527
        %v529 = vlaneseq
        %v530 = vshrl.u32 %v529, 7
        %v531 = vsub.s32 1, %v530
        %v532 = vrot.slane %v521, %v531
        %v533 = vlaneseq
        %v534 = vshrl.u32 %v533, 7
        %v535 = vsub.s32 2, %v534
        %v536 = vrot.slane %v521, %v535
        %v537 = vlaneseq
        %v538 = vshrl.u32 %v537, 7
        %v539 = vsub.s32 3, %v538
        %v540 = vrot.slane %v521, %v539
        %v541 = vlaneseq
        %v542 = vshrl.u32 %v541, 7
        %v543 = vsub.s32 4, %v542
        %v544 = vrot.slane %v521, %v543
        %v545 = vlaneseq
        %v546 = vshrl.u32 %v545, 7
        %v547 = vsub.s32 5, %v546
        %v548 = vrot.slane %v521, %v547
        %v549 = vlaneseq
        %v550 = vshrl.u32 %v549, 7
        %v551 = vsub.s32 6, %v550
        %v552 = vrot.slane %v521, %v551
        %v553 = vlaneseq
        %v554 = vshrl.u32 %v553, 7
        %v555 = vsub.s32 7, %v554
        %v556 = vrot.slane %v521, %v555
        %v557 = vlaneseq
        %v558 = vshrl.u32 %v557, 7
        %v559 = vsub.s32 0, %v558
        %v560 = vrot.slane %v522, %v559
        %v561 = vlaneseq
        %v562 = vshrl.u32 %v561, 7
        %v563 = vsub.s32 1, %v562
        %v564 = vrot.slane %v522, %v563
        %v595 = vunpack.c.l.b16 %v501
        %v596 = vunpack.c.h.b16 %v501
        %v597 = vunpack.c.l.b16 %v502
        %v598 = vunpack.c.h.b16 %v502
        %v599 = vunpack.c.l.b16 %v503
        %v600 = vunpack.c.h.b16 %v503
        %v601 = vunpack.c.l.b16 %v504
        %v602 = vunpack.c.h.b16 %v504
        %v603 = vunpack.c.l.b16 %v505
        %v604 = vunpack.c.h.b16 %v505
        %v605 = vunpack.c.l.b16 %v506
        %v606 = vunpack.c.h.b16 %v506
        %v607 = vunpack.c.l.b16 %v507
        %v608 = vunpack.c.h.b16 %v507
        %v609 = vunpack.c.l.b16 %v508
        %v610 = vunpack.c.h.b16 %v508
        %v611 = vunpack.c.l.b16 %v509
        %v612 = vunpack.c.h.b16 %v509
        %v613 = vunpack.c.l.b16 %v510
        %v614 = vunpack.c.h.b16 %v510
        %v615 = vunpack.c.l.b16 %v511
        %v616 = vunpack.c.h.b16 %v511
        %v617 = vunpack.c.l.b16 %v512
        %v618 = vunpack.c.h.b16 %v512
        %v619 = vunpack.c.l.b16 %v513
        %v620 = vunpack.c.h.b16 %v513
        %v621 = vunpack.c.l.b16 %v514
        %v622 = vunpack.c.h.b16 %v514
        %v623 = vunpack.c.l.b16 %v515
        %v624 = vunpack.c.h.b16 %v515
        %v625 = vunpack.c.l.b16 %v516
        %v626 = vunpack.c.h.b16 %v516
        %v627 = vunpack.c.l.b16 %v517
        %v628 = vunpack.c.h.b16 %v517
        %v629 = vunpack.c.l.b16 %v518
        %v630 = vunpack.c.h.b16 %v518
        %v631 = vunpack.c.l.b16 %v519
        %v632 = vunpack.c.h.b16 %v519
        %v633 = vunpack.c.l.b16 %v520
        %v634 = vunpack.c.h.b16 %v520
        %v635 = vpack.c.b16 %v605, %v595
        %v636 = vpack.c.b16 %v606, %v596
        %v637 = vpack.c.b16 %v607, %v597
        %v638 = vpack.c.b16 %v608, %v598
        %v639 = vpack.c.b16 %v609, %v599
        %v640 = vpack.c.b16 %v610, %v600
        %v641 = vpack.c.b16 %v611, %v601
        %v642 = vpack.c.b16 %v612, %v602
        %v643 = vpack.c.b16 %v613, %v603
        %v644 = vpack.c.b16 %v614, %v604
        %v645 = vpack.c.b16 %v625, %v615
        %v646 = vpack.c.b16 %v626, %v616
        %v647 = vpack.c.b16 %v627, %v617
        %v648 = vpack.c.b16 %v628, %v618
        %v649 = vpack.c.b16 %v629, %v619
        %v650 = vpack.c.b16 %v630, %v620
        %v651 = vpack.c.b16 %v631, %v621
        %v652 = vpack.c.b16 %v632, %v622
        %v653 = vpack.c.b16 %v633, %v623
        %v654 = vpack.c.b16 %v634, %v624
        %v676 = vsel %vm389, %v498, 0
        %v679 = vsel %vm389, %v499, 0
        %v682 = vsel %vm389, %v500, 0
        %684 = vmatprep.subr.bf16.mxu0 %v636
        %685 = vmatpush1.bf16.msra.mxu0 %v635
        %686 = vmatprep.subr.bf16.mxu0 %v646
        %687 = vmatpush1.bf16.msra.mxu0 %v645
        %688 = vmatprep.subr.bf16.mxu0 0
        %689 = vmatpush1.bf16.msra.mxu0 0
        %690 = vmatprep.subr.bf16.mxu0 0
        %691 = vmatpush1.bf16.msra.mxu0 0
        %692 = vmatprep.subr.bf16.mxu0 0
        %693 = vmatpush1.bf16.msra.mxu0 0
        %694 = vmatprep.subr.bf16.mxu0 0
        %695 = vmatpush1.bf16.msra.mxu0 0
        %696 = vmatprep.subr.bf16.mxu0 0
        %697 = vmatpush1.bf16.msra.mxu0 0
        %698 = vmatprep.subr.bf16.mxu0 0
        %699 = vmatpush1.bf16.msra.mxu0 0
        %700 = vmatprep.subr.bf16.mxu0 0
        %701 = vmatpush1.bf16.msra.mxu0 0
        %702 = vmatprep.subr.bf16.mxu0 0
        %703 = vmatpush1.bf16.msra.mxu0 0
        %704 = vmatprep.subr.bf16.mxu0 0
        %705 = vmatpush1.bf16.msra.mxu0 0
        %706 = vmatprep.subr.bf16.mxu0 0
        %707 = vmatpush1.bf16.msra.mxu0 0
        %708 = vmatprep.subr.bf16.mxu0 0
        %709 = vmatpush1.bf16.msra.mxu0 0
        %710 = vmatprep.subr.bf16.mxu0 0
        %711 = vmatpush1.bf16.msra.mxu0 0
        %712 = vmatprep.subr.bf16.mxu0 0
        %713 = vmatpush1.bf16.msra.mxu0 0
        %714 = vmatprep.subr.bf16.mxu0 0
        %715 = vmatpush1.bf16.msra.mxu0 0
        %716 = vmatprep.mubr.bf16.mxu0 0
        %717 = vmatmul.mubr.bf16.gmra.mrb[0].mxu0 %v676
        %v718 = vpop.f32.mrb[0].mxu0
        %v719 = vadd.f32 %v528, %v718
        %v720 = vpop.f32.mrb[0].mxu0
        %v721 = vadd.f32 %v532, %v720
        %v722 = vpop.f32.mrb[0].mxu0
        %v723 = vadd.f32 %v528, %v722
        %v724 = vpop.f32.mrb[0].mxu0
        %v725 = vadd.f32 %v532, %v724
        %726 = vmatprep.mubr.bf16.mxu0 0
        %727 = vmatmul.mubr.bf16.gmra.mrb[0].mxu0 %v679
        %v728 = vpop.f32.mrb[0].mxu0
        %v729 = vadd.f32 %v528, %v728
        %v730 = vpop.f32.mrb[0].mxu0
        %v731 = vadd.f32 %v532, %v730
        %v732 = vpop.f32.mrb[0].mxu0
        %v733 = vadd.f32 %v528, %v732
        %v734 = vpop.f32.mrb[0].mxu0
        %v735 = vadd.f32 %v532, %v734
        %736 = vmatprep.mubr.bf16.mxu0 0
        %737 = vmatmul.mubr.bf16.gmra.mrb[0].mxu0 %v682
        %v738 = vpop.f32.mrb[0].mxu0
        %v739 = vadd.f32 %v528, %v738
        %v740 = vpop.f32.mrb[0].mxu0
        %v741 = vadd.f32 %v532, %v740
        %v742 = vpop.f32.mrb[0].mxu0
        %v743 = vadd.f32 %v528, %v742
        %v744 = vpop.f32.mrb[0].mxu0
        %v745 = vadd.f32 %v532, %v744
        %746 = vdwg.mxu0
        %747 = vmatprep.subr.bf16.mxu0 %v638
        %748 = vmatpush1.bf16.msra.mxu0 %v637
        %749 = vmatprep.subr.bf16.mxu0 %v648
        %750 = vmatpush1.bf16.msra.mxu0 %v647
        %751 = vmatprep.subr.bf16.mxu0 0
        %752 = vmatpush1.bf16.msra.mxu0 0
        %753 = vmatprep.subr.bf16.mxu0 0
        %754 = vmatpush1.bf16.msra.mxu0 0
        %755 = vmatprep.subr.bf16.mxu0 0
        %756 = vmatpush1.bf16.msra.mxu0 0
        %757 = vmatprep.subr.bf16.mxu0 0
        %758 = vmatpush1.bf16.msra.mxu0 0
        %759 = vmatprep.subr.bf16.mxu0 0
        %760 = vmatpush1.bf16.msra.mxu0 0
        %761 = vmatprep.subr.bf16.mxu0 0
        %762 = vmatpush1.bf16.msra.mxu0 0
        %763 = vmatprep.subr.bf16.mxu0 0
        %764 = vmatpush1.bf16.msra.mxu0 0
        %765 = vmatprep.subr.bf16.mxu0 0
        %766 = vmatpush1.bf16.msra.mxu0 0
        %767 = vmatprep.subr.bf16.mxu0 0
        %768 = vmatpush1.bf16.msra.mxu0 0
        %769 = vmatprep.subr.bf16.mxu0 0
        %770 = vmatpush1.bf16.msra.mxu0 0
        %771 = vmatprep.subr.bf16.mxu0 0
        %772 = vmatpush1.bf16.msra.mxu0 0
        %773 = vmatprep.subr.bf16.mxu0 0
        %774 = vmatpush1.bf16.msra.mxu0 0
        %775 = vmatprep.subr.bf16.mxu0 0
        %776 = vmatpush1.bf16.msra.mxu0 0
        %777 = vmatprep.subr.bf16.mxu0 0
        %778 = vmatpush1.bf16.msra.mxu0 0
        %779 = vmatprep.mubr.bf16.mxu0 0
        %780 = vmatmul.mubr.bf16.gmra.mrb[0].mxu0 %v676
        %v781 = vpop.f32.mrb[0].mxu0
        %v782 = vadd.f32 %v536, %v781
        %v783 = vpop.f32.mrb[0].mxu0
        %v784 = vadd.f32 %v540, %v783
        %v785 = vpop.f32.mrb[0].mxu0
        %v786 = vadd.f32 %v536, %v785
        %v787 = vpop.f32.mrb[0].mxu0
        %v788 = vadd.f32 %v540, %v787
        %789 = vmatprep.mubr.bf16.mxu0 0
        %790 = vmatmul.mubr.bf16.gmra.mrb[0].mxu0 %v679
        %v791 = vpop.f32.mrb[0].mxu0
        %v792 = vadd.f32 %v536, %v791
        %v793 = vpop.f32.mrb[0].mxu0
        %v794 = vadd.f32 %v540, %v793
        %v795 = vpop.f32.mrb[0].mxu0
        %v796 = vadd.f32 %v536, %v795
        %v797 = vpop.f32.mrb[0].mxu0
        %v798 = vadd.f32 %v540, %v797
        %799 = vmatprep.mubr.bf16.mxu0 0
        %800 = vmatmul.mubr.bf16.gmra.mrb[0].mxu0 %v682
        %v801 = vpop.f32.mrb[0].mxu0
        %v802 = vadd.f32 %v536, %v801
        %v803 = vpop.f32.mrb[0].mxu0
        %v804 = vadd.f32 %v540, %v803
        %v805 = vpop.f32.mrb[0].mxu0
        %v806 = vadd.f32 %v536, %v805
        %v807 = vpop.f32.mrb[0].mxu0
        %v808 = vadd.f32 %v540, %v807
        %809 = vdwg.mxu0
        %810 = vmatprep.subr.bf16.mxu0 %v640
        %811 = vmatpush1.bf16.msra.mxu0 %v639
        %812 = vmatprep.subr.bf16.mxu0 %v650
        %813 = vmatpush1.bf16.msra.mxu0 %v649
        %814 = vmatprep.subr.bf16.mxu0 0
        %815 = vmatpush1.bf16.msra.mxu0 0
        %816 = vmatprep.subr.bf16.mxu0 0
        %817 = vmatpush1.bf16.msra.mxu0 0
        %818 = vmatprep.subr.bf16.mxu0 0
        %819 = vmatpush1.bf16.msra.mxu0 0
        %820 = vmatprep.subr.bf16.mxu0 0
        %821 = vmatpush1.bf16.msra.mxu0 0
        %822 = vmatprep.subr.bf16.mxu0 0
        %823 = vmatpush1.bf16.msra.mxu0 0
        %824 = vmatprep.subr.bf16.mxu0 0
        %825 = vmatpush1.bf16.msra.mxu0 0
        %826 = vmatprep.subr.bf16.mxu0 0
        %827 = vmatpush1.bf16.msra.mxu0 0
        %828 = vmatprep.subr.bf16.mxu0 0
        %829 = vmatpush1.bf16.msra.mxu0 0
        %830 = vmatprep.subr.bf16.mxu0 0
        %831 = vmatpush1.bf16.msra.mxu0 0
        %832 = vmatprep.subr.bf16.mxu0 0
        %833 = vmatpush1.bf16.msra.mxu0 0
        %834 = vmatprep.subr.bf16.mxu0 0
        %835 = vmatpush1.bf16.msra.mxu0 0
        %836 = vmatprep.subr.bf16.mxu0 0
        %837 = vmatpush1.bf16.msra.mxu0 0
        %838 = vmatprep.subr.bf16.mxu0 0
        %839 = vmatpush1.bf16.msra.mxu0 0
        %840 = vmatprep.subr.bf16.mxu0 0
        %841 = vmatpush1.bf16.msra.mxu0 0
        %842 = vmatprep.mubr.bf16.mxu0 0
        %843 = vmatmul.mubr.bf16.gmra.mrb[0].mxu0 %v676
        %v844 = vpop.f32.mrb[0].mxu0
        %v845 = vadd.f32 %v544, %v844
        %v846 = vpop.f32.mrb[0].mxu0
        %v847 = vadd.f32 %v548, %v846
        %v848 = vpop.f32.mrb[0].mxu0
        %v849 = vadd.f32 %v544, %v848
        %v850 = vpop.f32.mrb[0].mxu0
        %v851 = vadd.f32 %v548, %v850
        %852 = vmatprep.mubr.bf16.mxu0 0
        %853 = vmatmul.mubr.bf16.gmra.mrb[0].mxu0 %v679
        %v854 = vpop.f32.mrb[0].mxu0
        %v855 = vadd.f32 %v544, %v854
        %v856 = vpop.f32.mrb[0].mxu0
        %v857 = vadd.f32 %v548, %v856
        %v858 = vpop.f32.mrb[0].mxu0
        %v859 = vadd.f32 %v544, %v858
        %v860 = vpop.f32.mrb[0].mxu0
        %v861 = vadd.f32 %v548, %v860
        %862 = vmatprep.mubr.bf16.mxu0 0
        %863 = vmatmul.mubr.bf16.gmra.mrb[0].mxu0 %v682
        %v864 = vpop.f32.mrb[0].mxu0
        %v865 = vadd.f32 %v544, %v864
        %v866 = vpop.f32.mrb[0].mxu0
        %v867 = vadd.f32 %v548, %v866
        %v868 = vpop.f32.mrb[0].mxu0
        %v869 = vadd.f32 %v544, %v868
        %v870 = vpop.f32.mrb[0].mxu0
        %v871 = vadd.f32 %v548, %v870
        %872 = vdwg.mxu0
        %873 = vmatprep.subr.bf16.mxu0 %v642
        %874 = vmatpush1.bf16.msra.mxu0 %v641
        %875 = vmatprep.subr.bf16.mxu0 %v652
        %876 = vmatpush1.bf16.msra.mxu0 %v651
        %877 = vmatprep.subr.bf16.mxu0 0
        %878 = vmatpush1.bf16.msra.mxu0 0
        %879 = vmatprep.subr.bf16.mxu0 0
        %880 = vmatpush1.bf16.msra.mxu0 0
        %881 = vmatprep.subr.bf16.mxu0 0
        %882 = vmatpush1.bf16.msra.mxu0 0
        %883 = vmatprep.subr.bf16.mxu0 0
        %884 = vmatpush1.bf16.msra.mxu0 0
        %885 = vmatprep.subr.bf16.mxu0 0
        %886 = vmatpush1.bf16.msra.mxu0 0
        %887 = vmatprep.subr.bf16.mxu0 0
        %888 = vmatpush1.bf16.msra.mxu0 0
        %889 = vmatprep.subr.bf16.mxu0 0
        %890 = vmatpush1.bf16.msra.mxu0 0
        %891 = vmatprep.subr.bf16.mxu0 0
        %892 = vmatpush1.bf16.msra.mxu0 0
        %893 = vmatprep.subr.bf16.mxu0 0
        %894 = vmatpush1.bf16.msra.mxu0 0
        %895 = vmatprep.subr.bf16.mxu0 0
        %896 = vmatpush1.bf16.msra.mxu0 0
        %897 = vmatprep.subr.bf16.mxu0 0
        %898 = vmatpush1.bf16.msra.mxu0 0
        %899 = vmatprep.subr.bf16.mxu0 0
        %900 = vmatpush1.bf16.msra.mxu0 0
        %901 = vmatprep.subr.bf16.mxu0 0
        %902 = vmatpush1.bf16.msra.mxu0 0
        %903 = vmatprep.subr.bf16.mxu0 0
        %904 = vmatpush1.bf16.msra.mxu0 0
        %905 = vmatprep.mubr.bf16.mxu0 0
        %906 = vmatmul.mubr.bf16.gmra.mrb[0].mxu0 %v676
        %v907 = vpop.f32.mrb[0].mxu0
        %v908 = vadd.f32 %v552, %v907
        %v909 = vpop.f32.mrb[0].mxu0
        %v910 = vadd.f32 %v556, %v909
        %v911 = vpop.f32.mrb[0].mxu0
        %v912 = vadd.f32 %v552, %v911
        %v913 = vpop.f32.mrb[0].mxu0
        %v914 = vadd.f32 %v556, %v913
        %915 = vmatprep.mubr.bf16.mxu0 0
        %916 = vmatmul.mubr.bf16.gmra.mrb[0].mxu0 %v679
        %v917 = vpop.f32.mrb[0].mxu0
        %v918 = vadd.f32 %v552, %v917
        %v919 = vpop.f32.mrb[0].mxu0
        %v920 = vadd.f32 %v556, %v919
        %v921 = vpop.f32.mrb[0].mxu0
        %v922 = vadd.f32 %v552, %v921
        %v923 = vpop.f32.mrb[0].mxu0
        %v924 = vadd.f32 %v556, %v923
        %925 = vmatprep.mubr.bf16.mxu0 0
        %926 = vmatmul.mubr.bf16.gmra.mrb[0].mxu0 %v682
        %v927 = vpop.f32.mrb[0].mxu0
        %v928 = vadd.f32 %v552, %v927
        %v929 = vpop.f32.mrb[0].mxu0
        %v930 = vadd.f32 %v556, %v929
        %v931 = vpop.f32.mrb[0].mxu0
        %v932 = vadd.f32 %v552, %v931
        %v933 = vpop.f32.mrb[0].mxu0
        %v934 = vadd.f32 %v556, %v933
        %935 = vdwg.mxu0
        %936 = vmatprep.subr.bf16.mxu0 %v644
        %937 = vmatpush1.bf16.msra.mxu0 %v643
        %938 = vmatprep.subr.bf16.mxu0 %v654
        %939 = vmatpush1.bf16.msra.mxu0 %v653
        %940 = vmatprep.subr.bf16.mxu0 0
        %941 = vmatpush1.bf16.msra.mxu0 0
        %942 = vmatprep.subr.bf16.mxu0 0
        %943 = vmatpush1.bf16.msra.mxu0 0
        %944 = vmatprep.subr.bf16.mxu0 0
        %945 = vmatpush1.bf16.msra.mxu0 0
        %946 = vmatprep.subr.bf16.mxu0 0
        %947 = vmatpush1.bf16.msra.mxu0 0
        %948 = vmatprep.subr.bf16.mxu0 0
        %949 = vmatpush1.bf16.msra.mxu0 0
        %950 = vmatprep.subr.bf16.mxu0 0
        %951 = vmatpush1.bf16.msra.mxu0 0
        %952 = vmatprep.subr.bf16.mxu0 0
        %953 = vmatpush1.bf16.msra.mxu0 0
        %954 = vmatprep.subr.bf16.mxu0 0
        %955 = vmatpush1.bf16.msra.mxu0 0
        %956 = vmatprep.subr.bf16.mxu0 0
        %957 = vmatpush1.bf16.msra.mxu0 0
        %958 = vmatprep.subr.bf16.mxu0 0
        %959 = vmatpush1.bf16.msra.mxu0 0
        %960 = vmatprep.subr.bf16.mxu0 0
        %961 = vmatpush1.bf16.msra.mxu0 0
        %962 = vmatprep.subr.bf16.mxu0 0
        %963 = vmatpush1.bf16.msra.mxu0 0
        %964 = vmatprep.subr.bf16.mxu0 0
        %965 = vmatpush1.bf16.msra.mxu0 0
        %966 = vmatprep.subr.bf16.mxu0 0
        %967 = vmatpush1.bf16.msra.mxu0 0
        %968 = vmatprep.mubr.bf16.mxu0 0
        %969 = vmatmul.mubr.bf16.gmra.mrb[0].mxu0 %v676
        %v970 = vpop.f32.mrb[0].mxu0
        %v971 = vadd.f32 %v560, %v970
        %v972 = vpop.f32.mrb[0].mxu0
        %v973 = vadd.f32 %v564, %v972
        %v974 = vpop.f32.mrb[0].mxu0
        %v975 = vadd.f32 %v560, %v974
        %v976 = vpop.f32.mrb[0].mxu0
        %v977 = vadd.f32 %v564, %v976
        %978 = vmatprep.mubr.bf16.mxu0 0
        %979 = vmatmul.mubr.bf16.gmra.mrb[0].mxu0 %v679
        %v980 = vpop.f32.mrb[0].mxu0
        %v981 = vadd.f32 %v560, %v980
        %v982 = vpop.f32.mrb[0].mxu0
        %v983 = vadd.f32 %v564, %v982
        %v984 = vpop.f32.mrb[0].mxu0
        %v985 = vadd.f32 %v560, %v984
        %v986 = vpop.f32.mrb[0].mxu0
        %v987 = vadd.f32 %v564, %v986
        %988 = vmatprep.mubr.bf16.mxu0 0
        %989 = vmatmul.mubr.bf16.gmra.mrb[0].mxu0 %v682
        %v990 = vpop.f32.mrb[0].mxu0
        %v991 = vadd.f32 %v560, %v990
        %v992 = vpop.f32.mrb[0].mxu0
        %v993 = vadd.f32 %v564, %v992
        %v994 = vpop.f32.mrb[0].mxu0
        %v995 = vadd.f32 %v560, %v994
        %v996 = vpop.f32.mrb[0].mxu0
        %v997 = vadd.f32 %v564, %v996
        %998 = vdwg.mxu0
        %v999 = vxor.u32 %v719, 2147483648
        %v1000 = vxor.u32 %v721, 2147483648
        %v1001 = vxor.u32 %v782, 2147483648
        %v1002 = vxor.u32 %v784, 2147483648
        %v1003 = vxor.u32 %v845, 2147483648
        %v1004 = vxor.u32 %v847, 2147483648
        %v1005 = vxor.u32 %v908, 2147483648
        %v1006 = vxor.u32 %v910, 2147483648
        %v1007 = vxor.u32 %v971, 2147483648
        %v1008 = vxor.u32 %v973, 2147483648
        %v1009 = vxor.u32 %v723, 2147483648
        %v1010 = vxor.u32 %v725, 2147483648
        %v1011 = vxor.u32 %v786, 2147483648
        %v1012 = vxor.u32 %v788, 2147483648
        %v1013 = vxor.u32 %v849, 2147483648
        %v1014 = vxor.u32 %v851, 2147483648
        %v1015 = vxor.u32 %v912, 2147483648
        %v1016 = vxor.u32 %v914, 2147483648
        %v1017 = vxor.u32 %v975, 2147483648
        %v1018 = vxor.u32 %v977, 2147483648
        %v1019 = vxor.u32 %v729, 2147483648
        %v1020 = vxor.u32 %v731, 2147483648
        %v1021 = vxor.u32 %v792, 2147483648
        %v1022 = vxor.u32 %v794, 2147483648
        %v1023 = vxor.u32 %v855, 2147483648
        %v1024 = vxor.u32 %v857, 2147483648
        %v1025 = vxor.u32 %v918, 2147483648
        %v1026 = vxor.u32 %v920, 2147483648
        %v1027 = vxor.u32 %v981, 2147483648
        %v1028 = vxor.u32 %v983, 2147483648
        %v1029 = vxor.u32 %v733, 2147483648
        %v1030 = vxor.u32 %v735, 2147483648
        %v1031 = vxor.u32 %v796, 2147483648
        %v1032 = vxor.u32 %v798, 2147483648
        %v1033 = vxor.u32 %v859, 2147483648
        %v1034 = vxor.u32 %v861, 2147483648
        %v1035 = vxor.u32 %v922, 2147483648
        %v1036 = vxor.u32 %v924, 2147483648
        %v1037 = vxor.u32 %v985, 2147483648
        %v1038 = vxor.u32 %v987, 2147483648
        %v1039 = vxor.u32 %v739, 2147483648
        %v1040 = vxor.u32 %v741, 2147483648
        %v1041 = vxor.u32 %v802, 2147483648
        %v1042 = vxor.u32 %v804, 2147483648
        %v1043 = vxor.u32 %v865, 2147483648
        %v1044 = vxor.u32 %v867, 2147483648
        %v1045 = vxor.u32 %v928, 2147483648
        %v1046 = vxor.u32 %v930, 2147483648
        %v1047 = vxor.u32 %v991, 2147483648
        %v1048 = vxor.u32 %v993, 2147483648
        %v1049 = vxor.u32 %v743, 2147483648
        %v1050 = vxor.u32 %v745, 2147483648
        %v1051 = vxor.u32 %v806, 2147483648
        %v1052 = vxor.u32 %v808, 2147483648
        %v1053 = vxor.u32 %v869, 2147483648
        %v1054 = vxor.u32 %v871, 2147483648
        %v1055 = vxor.u32 %v932, 2147483648
        %v1056 = vxor.u32 %v934, 2147483648
        %v1057 = vxor.u32 %v995, 2147483648
        %v1058 = vxor.u32 %v997, 2147483648
        %v1059 = vmul.f32 %v999, 1.442695
        %v1060 = vpow.pop %v1059
        %v1061 = vmul.f32 %v1000, 1.442695
        %v1062 = vpow.pop %v1061
        %v1063 = vmul.f32 %v1001, 1.442695
        %v1064 = vpow.pop %v1063
        %v1065 = vmul.f32 %v1002, 1.442695
        %v1066 = vpow.pop %v1065
        %v1067 = vmul.f32 %v1003, 1.442695
        %v1068 = vpow.pop %v1067
        %v1069 = vmul.f32 %v1004, 1.442695
        %v1070 = vpow.pop %v1069
        %v1071 = vmul.f32 %v1005, 1.442695
        %v1072 = vpow.pop %v1071
        %v1073 = vmul.f32 %v1006, 1.442695
        %v1074 = vpow.pop %v1073
        %v1075 = vmul.f32 %v1007, 1.442695
        %v1076 = vpow.pop %v1075
        %v1077 = vmul.f32 %v1008, 1.442695
        %v1078 = vpow.pop %v1077
        %v1079 = vmul.f32 %v1009, 1.442695
        %v1080 = vpow.pop %v1079
        %v1081 = vmul.f32 %v1010, 1.442695
        %v1082 = vpow.pop %v1081
        %v1083 = vmul.f32 %v1011, 1.442695
        %v1084 = vpow.pop %v1083
        %v1085 = vmul.f32 %v1012, 1.442695
        %v1086 = vpow.pop %v1085
        %v1087 = vmul.f32 %v1013, 1.442695
        %v1088 = vpow.pop %v1087
        %v1089 = vmul.f32 %v1014, 1.442695
        %v1090 = vpow.pop %v1089
        %v1091 = vmul.f32 %v1015, 1.442695
        %v1092 = vpow.pop %v1091
        %v1093 = vmul.f32 %v1016, 1.442695
        %v1094 = vpow.pop %v1093
        %v1095 = vmul.f32 %v1017, 1.442695
        %v1096 = vpow.pop %v1095
        %v1097 = vmul.f32 %v1018, 1.442695
        %v1098 = vpow.pop %v1097
        %v1099 = vmul.f32 %v1019, 1.442695
        %v1100 = vpow.pop %v1099
        %v1101 = vmul.f32 %v1020, 1.442695
        %v1102 = vpow.pop %v1101
        %v1103 = vmul.f32 %v1021, 1.442695
        %v1104 = vpow.pop %v1103
        %v1105 = vmul.f32 %v1022, 1.442695
        %v1106 = vpow.pop %v1105
        %v1107 = vmul.f32 %v1023, 1.442695
        %v1108 = vpow.pop %v1107
        %v1109 = vmul.f32 %v1024, 1.442695
        %v1110 = vpow.pop %v1109
        %v1111 = vmul.f32 %v1025, 1.442695
        %v1112 = vpow.pop %v1111
        %v1113 = vmul.f32 %v1026, 1.442695
        %v1114 = vpow.pop %v1113
        %v1115 = vmul.f32 %v1027, 1.442695
        %v1116 = vpow.pop %v1115
        %v1117 = vmul.f32 %v1028, 1.442695
        %v1118 = vpow.pop %v1117
        %v1119 = vmul.f32 %v1029, 1.442695
        %v1120 = vpow.pop %v1119
        %v1121 = vmul.f32 %v1030, 1.442695
        %v1122 = vpow.pop %v1121
        %v1123 = vmul.f32 %v1031, 1.442695
        %v1124 = vpow.pop %v1123
        %v1125 = vmul.f32 %v1032, 1.442695
        %v1126 = vpow.pop %v1125
        %v1127 = vmul.f32 %v1033, 1.442695
        %v1128 = vpow.pop %v1127
        %v1129 = vmul.f32 %v1034, 1.442695
        %v1130 = vpow.pop %v1129
        %v1131 = vmul.f32 %v1035, 1.442695
        %v1132 = vpow.pop %v1131
        %v1133 = vmul.f32 %v1036, 1.442695
        %v1134 = vpow.pop %v1133
        %v1135 = vmul.f32 %v1037, 1.442695
        %v1136 = vpow.pop %v1135
        %v1137 = vmul.f32 %v1038, 1.442695
        %v1138 = vpow.pop %v1137
        %v1139 = vmul.f32 %v1039, 1.442695
        %v1140 = vpow.pop %v1139
        %v1141 = vmul.f32 %v1040, 1.442695
        %v1142 = vpow.pop %v1141
        %v1143 = vmul.f32 %v1041, 1.442695
        %v1144 = vpow.pop %v1143
        %v1145 = vmul.f32 %v1042, 1.442695
        %v1146 = vpow.pop %v1145
        %v1147 = vmul.f32 %v1043, 1.442695
        %v1148 = vpow.pop %v1147
        %v1149 = vmul.f32 %v1044, 1.442695
        %v1150 = vpow.pop %v1149
        %v1151 = vmul.f32 %v1045, 1.442695
        %v1152 = vpow.pop %v1151
        %v1153 = vmul.f32 %v1046, 1.442695
        %v1154 = vpow.pop %v1153
        %v1155 = vmul.f32 %v1047, 1.442695
        %v1156 = vpow.pop %v1155
        %v1157 = vmul.f32 %v1048, 1.442695
        %v1158 = vpow.pop %v1157
        %v1159 = vmul.f32 %v1049, 1.442695
        %v1160 = vpow.pop %v1159
        %v1161 = vmul.f32 %v1050, 1.442695
        %v1162 = vpow.pop %v1161
        %v1163 = vmul.f32 %v1051, 1.442695
        %v1164 = vpow.pop %v1163
        %v1165 = vmul.f32 %v1052, 1.442695
        %v1166 = vpow.pop %v1165
        %v1167 = vmul.f32 %v1053, 1.442695
        %v1168 = vpow.pop %v1167
        %v1169 = vmul.f32 %v1054, 1.442695
        %v1170 = vpow.pop %v1169
        %v1171 = vmul.f32 %v1055, 1.442695
        %v1172 = vpow.pop %v1171
        %v1173 = vmul.f32 %v1056, 1.442695
        %v1174 = vpow.pop %v1173
        %v1175 = vmul.f32 %v1057, 1.442695
        %v1176 = vpow.pop %v1175
        %v1177 = vmul.f32 %v1058, 1.442695
        %v1178 = vpow.pop %v1177
        %v1179 = vadd.f32 %v1060, 1.0
        %v1180 = vadd.f32 %v1062, 1.0
        %v1181 = vadd.f32 %v1064, 1.0
        %v1182 = vadd.f32 %v1066, 1.0
        %v1183 = vadd.f32 %v1068, 1.0
        %v1184 = vadd.f32 %v1070, 1.0
        %v1185 = vadd.f32 %v1072, 1.0
        %v1186 = vadd.f32 %v1074, 1.0
        %v1187 = vadd.f32 %v1076, 1.0
        %v1188 = vadd.f32 %v1078, 1.0
        %v1189 = vadd.f32 %v1080, 1.0
        %v1190 = vadd.f32 %v1082, 1.0
        %v1191 = vadd.f32 %v1084, 1.0
        %v1192 = vadd.f32 %v1086, 1.0
        %v1193 = vadd.f32 %v1088, 1.0
        %v1194 = vadd.f32 %v1090, 1.0
        %v1195 = vadd.f32 %v1092, 1.0
        %v1196 = vadd.f32 %v1094, 1.0
        %v1197 = vadd.f32 %v1096, 1.0
        %v1198 = vadd.f32 %v1098, 1.0
        %v1199 = vadd.f32 %v1100, 1.0
        %v1200 = vadd.f32 %v1102, 1.0
        %v1201 = vadd.f32 %v1104, 1.0
        %v1202 = vadd.f32 %v1106, 1.0
        %v1203 = vadd.f32 %v1108, 1.0
        %v1204 = vadd.f32 %v1110, 1.0
        %v1205 = vadd.f32 %v1112, 1.0
        %v1206 = vadd.f32 %v1114, 1.0
        %v1207 = vadd.f32 %v1116, 1.0
        %v1208 = vadd.f32 %v1118, 1.0
        %v1209 = vadd.f32 %v1120, 1.0
        %v1210 = vadd.f32 %v1122, 1.0
        %v1211 = vadd.f32 %v1124, 1.0
        %v1212 = vadd.f32 %v1126, 1.0
        %v1213 = vadd.f32 %v1128, 1.0
        %v1214 = vadd.f32 %v1130, 1.0
        %v1215 = vadd.f32 %v1132, 1.0
        %v1216 = vadd.f32 %v1134, 1.0
        %v1217 = vadd.f32 %v1136, 1.0
        %v1218 = vadd.f32 %v1138, 1.0
        %v1219 = vadd.f32 %v1140, 1.0
        %v1220 = vadd.f32 %v1142, 1.0
        %v1221 = vadd.f32 %v1144, 1.0
        %v1222 = vadd.f32 %v1146, 1.0
        %v1223 = vadd.f32 %v1148, 1.0
        %v1224 = vadd.f32 %v1150, 1.0
        %v1225 = vadd.f32 %v1152, 1.0
        %v1226 = vadd.f32 %v1154, 1.0
        %v1227 = vadd.f32 %v1156, 1.0
        %v1228 = vadd.f32 %v1158, 1.0
        %v1229 = vadd.f32 %v1160, 1.0
        %v1230 = vadd.f32 %v1162, 1.0
        %v1231 = vadd.f32 %v1164, 1.0
        %v1232 = vadd.f32 %v1166, 1.0
        %v1233 = vadd.f32 %v1168, 1.0
        %v1234 = vadd.f32 %v1170, 1.0
        %v1235 = vadd.f32 %v1172, 1.0
        %v1236 = vadd.f32 %v1174, 1.0
        %v1237 = vadd.f32 %v1176, 1.0
        %v1238 = vadd.f32 %v1178, 1.0
        %v1239 = vrcp.pop %v1179
        %v1240 = vmul.f32 1.0, %v1239
        %v1241 = vrcp.pop %v1180
        %v1242 = vmul.f32 1.0, %v1241
        %v1243 = vrcp.pop %v1181
        %v1244 = vmul.f32 1.0, %v1243
        %v1245 = vrcp.pop %v1182
        %v1246 = vmul.f32 1.0, %v1245
        %v1247 = vrcp.pop %v1183
        %v1248 = vmul.f32 1.0, %v1247
        %v1249 = vrcp.pop %v1184
        %v1250 = vmul.f32 1.0, %v1249
        %v1251 = vrcp.pop %v1185
        %v1252 = vmul.f32 1.0, %v1251
        %v1253 = vrcp.pop %v1186
        %v1254 = vmul.f32 1.0, %v1253
        %v1255 = vrcp.pop %v1187
        %v1256 = vmul.f32 1.0, %v1255
        %v1257 = vrcp.pop %v1188
        %v1258 = vmul.f32 1.0, %v1257
        %v1259 = vrcp.pop %v1189
        %v1260 = vmul.f32 1.0, %v1259
        %v1261 = vrcp.pop %v1190
        %v1262 = vmul.f32 1.0, %v1261
        %v1263 = vrcp.pop %v1191
        %v1264 = vmul.f32 1.0, %v1263
        %v1265 = vrcp.pop %v1192
        %v1266 = vmul.f32 1.0, %v1265
        %v1267 = vrcp.pop %v1193
        %v1268 = vmul.f32 1.0, %v1267
        %v1269 = vrcp.pop %v1194
        %v1270 = vmul.f32 1.0, %v1269
        %v1271 = vrcp.pop %v1195
        %v1272 = vmul.f32 1.0, %v1271
        %v1273 = vrcp.pop %v1196
        %v1274 = vmul.f32 1.0, %v1273
        %v1275 = vrcp.pop %v1197
        %v1276 = vmul.f32 1.0, %v1275
        %v1277 = vrcp.pop %v1198
        %v1278 = vmul.f32 1.0, %v1277
        %v1279 = vrcp.pop %v1199
        %v1280 = vmul.f32 1.0, %v1279
        %v1281 = vrcp.pop %v1200
        %v1282 = vmul.f32 1.0, %v1281
        %v1283 = vrcp.pop %v1201
        %v1284 = vmul.f32 1.0, %v1283
        %v1285 = vrcp.pop %v1202
        %v1286 = vmul.f32 1.0, %v1285
        %v1287 = vrcp.pop %v1203
        %v1288 = vmul.f32 1.0, %v1287
        %v1289 = vrcp.pop %v1204
        %v1290 = vmul.f32 1.0, %v1289
        %v1291 = vrcp.pop %v1205
        %v1292 = vmul.f32 1.0, %v1291
        %v1293 = vrcp.pop %v1206
        %v1294 = vmul.f32 1.0, %v1293
        %v1295 = vrcp.pop %v1207
        %v1296 = vmul.f32 1.0, %v1295
        %v1297 = vrcp.pop %v1208
        %v1298 = vmul.f32 1.0, %v1297
        %v1299 = vrcp.pop %v1209
        %v1300 = vmul.f32 1.0, %v1299
        %v1301 = vrcp.pop %v1210
        %v1302 = vmul.f32 1.0, %v1301
        %v1303 = vrcp.pop %v1211
        %v1304 = vmul.f32 1.0, %v1303
        %v1305 = vrcp.pop %v1212
        %v1306 = vmul.f32 1.0, %v1305
        %v1307 = vrcp.pop %v1213
        %v1308 = vmul.f32 1.0, %v1307
        %v1309 = vrcp.pop %v1214
        %v1310 = vmul.f32 1.0, %v1309
        %v1311 = vrcp.pop %v1215
        %v1312 = vmul.f32 1.0, %v1311
        %v1313 = vrcp.pop %v1216
        %v1314 = vmul.f32 1.0, %v1313
        %v1315 = vrcp.pop %v1217
        %v1316 = vmul.f32 1.0, %v1315
        %v1317 = vrcp.pop %v1218
        %v1318 = vmul.f32 1.0, %v1317
        %v1319 = vrcp.pop %v1219
        %v1320 = vmul.f32 1.0, %v1319
        %v1321 = vrcp.pop %v1220
        %v1322 = vmul.f32 1.0, %v1321
        %v1323 = vrcp.pop %v1221
        %v1324 = vmul.f32 1.0, %v1323
        %v1325 = vrcp.pop %v1222
        %v1326 = vmul.f32 1.0, %v1325
        %v1327 = vrcp.pop %v1223
        %v1328 = vmul.f32 1.0, %v1327
        %v1329 = vrcp.pop %v1224
        %v1330 = vmul.f32 1.0, %v1329
        %v1331 = vrcp.pop %v1225
        %v1332 = vmul.f32 1.0, %v1331
        %v1333 = vrcp.pop %v1226
        %v1334 = vmul.f32 1.0, %v1333
        %v1335 = vrcp.pop %v1227
        %v1336 = vmul.f32 1.0, %v1335
        %v1337 = vrcp.pop %v1228
        %v1338 = vmul.f32 1.0, %v1337
        %v1339 = vrcp.pop %v1229
        %v1340 = vmul.f32 1.0, %v1339
        %v1341 = vrcp.pop %v1230
        %v1342 = vmul.f32 1.0, %v1341
        %v1343 = vrcp.pop %v1231
        %v1344 = vmul.f32 1.0, %v1343
        %v1345 = vrcp.pop %v1232
        %v1346 = vmul.f32 1.0, %v1345
        %v1347 = vrcp.pop %v1233
        %v1348 = vmul.f32 1.0, %v1347
        %v1349 = vrcp.pop %v1234
        %v1350 = vmul.f32 1.0, %v1349
        %v1351 = vrcp.pop %v1235
        %v1352 = vmul.f32 1.0, %v1351
        %v1353 = vrcp.pop %v1236
        %v1354 = vmul.f32 1.0, %v1353
        %v1355 = vrcp.pop %v1237
        %v1356 = vmul.f32 1.0, %v1355
        %v1357 = vrcp.pop %v1238
        %v1358 = vmul.f32 1.0, %v1357
        %v1359 = vmul.f32 %v719, %v1240
        %v1360 = vmul.f32 %v721, %v1242
        %v1361 = vmul.f32 %v782, %v1244
        %v1362 = vmul.f32 %v784, %v1246
        %v1363 = vmul.f32 %v845, %v1248
        %v1364 = vmul.f32 %v847, %v1250
        %v1365 = vmul.f32 %v908, %v1252
        %v1366 = vmul.f32 %v910, %v1254
        %v1367 = vmul.f32 %v971, %v1256
        %v1368 = vmul.f32 %v973, %v1258
        %v1369 = vmul.f32 %v723, %v1260
        %v1370 = vmul.f32 %v725, %v1262
        %v1371 = vmul.f32 %v786, %v1264
        %v1372 = vmul.f32 %v788, %v1266
        %v1373 = vmul.f32 %v849, %v1268
        %v1374 = vmul.f32 %v851, %v1270
        %v1375 = vmul.f32 %v912, %v1272
        %v1376 = vmul.f32 %v914, %v1274
        %v1377 = vmul.f32 %v975, %v1276
        %v1378 = vmul.f32 %v977, %v1278
        %v1379 = vmul.f32 %v729, %v1280
        %v1380 = vmul.f32 %v731, %v1282
        %v1381 = vmul.f32 %v792, %v1284
        %v1382 = vmul.f32 %v794, %v1286
        %v1383 = vmul.f32 %v855, %v1288
        %v1384 = vmul.f32 %v857, %v1290
        %v1385 = vmul.f32 %v918, %v1292
        %v1386 = vmul.f32 %v920, %v1294
        %v1387 = vmul.f32 %v981, %v1296
        %v1388 = vmul.f32 %v983, %v1298
        %v1389 = vmul.f32 %v733, %v1300
        %v1390 = vmul.f32 %v735, %v1302
        %v1391 = vmul.f32 %v796, %v1304
        %v1392 = vmul.f32 %v798, %v1306
        %v1393 = vmul.f32 %v859, %v1308
        %v1394 = vmul.f32 %v861, %v1310
        %v1395 = vmul.f32 %v922, %v1312
        %v1396 = vmul.f32 %v924, %v1314
        %v1397 = vmul.f32 %v985, %v1316
        %v1398 = vmul.f32 %v987, %v1318
        %v1399 = vmul.f32 %v739, %v1320
        %v1400 = vmul.f32 %v741, %v1322
        %v1401 = vmul.f32 %v802, %v1324
        %v1402 = vmul.f32 %v804, %v1326
        %v1403 = vmul.f32 %v865, %v1328
        %v1404 = vmul.f32 %v867, %v1330
        %v1405 = vmul.f32 %v928, %v1332
        %v1406 = vmul.f32 %v930, %v1334
        %v1407 = vmul.f32 %v991, %v1336
        %v1408 = vmul.f32 %v993, %v1338
        %v1409 = vmul.f32 %v743, %v1340
        %v1410 = vmul.f32 %v745, %v1342
        %v1411 = vmul.f32 %v806, %v1344
        %v1412 = vmul.f32 %v808, %v1346
        %v1413 = vmul.f32 %v869, %v1348
        %v1414 = vmul.f32 %v871, %v1350
        %v1415 = vmul.f32 %v932, %v1352
        %v1416 = vmul.f32 %v934, %v1354
        %v1417 = vmul.f32 %v995, %v1356
        %v1418 = vmul.f32 %v997, %v1358
        %s1419 = smul.u32 %s28, 48
        %v1420 = vlaneseq
        %v1421 = vshrl.u32 %v1420, 7
        %v1422 = vadd.s32 %v1421, 8
        %v1423 = vadd.s32 %v1421, 16
        %v1424 = vadd.s32 %v1421, 24
        %v1425 = vadd.s32 %v1421, 32
        %v1426 = vadd.s32 %v1421, 40
        %v1427 = vstv %s1419
        %v1428 = vadd.s32 %v1427, %v1421
        %v1429 = vadd.s32 %v1427, %v1422
        %v1430 = vadd.s32 %v1427, %v1423
        %v1431 = vadd.s32 %v1427, %v1424
        %v1432 = vadd.s32 %v1427, %v1425
        %v1433 = vadd.s32 %v1427, %v1426
        %vm1434 = vcmp.lt.s32.totalorder %v1428, 64
        %vm1435 = vcmp.lt.s32.totalorder %v1429, 64
        %vm1436 = vcmp.lt.s32.totalorder %v1430, 64
        %vm1437 = vcmp.lt.s32.totalorder %v1431, 64
        %vm1438 = vcmp.lt.s32.totalorder %v1432, 64
        %vm1439 = vcmp.lt.s32.totalorder %v1433, 64
        %v1440 = vsel %vm1434, 1, 0
        %v1441 = vsel %vm1435, 1, 0
        %v1442 = vsel %vm1436, 1, 0
        %v1443 = vsel %vm1437, 1, 0
        %v1444 = vsel %vm1438, 1, 0
        %v1445 = vsel %vm1439, 1, 0
        %vm1446 = vcmp.eq.s32.totalorder %v1440, 1
        %vm1447 = vcmp.eq.s32.totalorder %v1441, 1
        %vm1448 = vcmp.eq.s32.totalorder %v1442, 1
        %vm1449 = vcmp.eq.s32.totalorder %v1443, 1
        %vm1450 = vcmp.eq.s32.totalorder %v1444, 1
        %vm1451 = vcmp.eq.s32.totalorder %v1445, 1
        %v1452 = vsel %vm1446, %v1359, 0.0
        %v1453 = vsel %vm1446, %v1360, 0.0
        %v1454 = vsel %vm1446, %v1361, 0.0
        %v1455 = vsel %vm1446, %v1362, 0.0
        %v1456 = vsel %vm1446, %v1363, 0.0
        %v1457 = vsel %vm1446, %v1364, 0.0
        %v1458 = vsel %vm1446, %v1365, 0.0
        %v1459 = vsel %vm1446, %v1366, 0.0
        %v1460 = vsel %vm1446, %v1367, 0.0
        %v1461 = vsel %vm1446, %v1368, 0.0
        %v1462 = vsel %vm1447, %v1369, 0.0
        %v1463 = vsel %vm1447, %v1370, 0.0
        %v1464 = vsel %vm1447, %v1371, 0.0
        %v1465 = vsel %vm1447, %v1372, 0.0
        %v1466 = vsel %vm1447, %v1373, 0.0
        %v1467 = vsel %vm1447, %v1374, 0.0
        %v1468 = vsel %vm1447, %v1375, 0.0
        %v1469 = vsel %vm1447, %v1376, 0.0
        %v1470 = vsel %vm1447, %v1377, 0.0
        %v1471 = vsel %vm1447, %v1378, 0.0
        %v1472 = vsel %vm1448, %v1379, 0.0
        %v1473 = vsel %vm1448, %v1380, 0.0
        %v1474 = vsel %vm1448, %v1381, 0.0
        %v1475 = vsel %vm1448, %v1382, 0.0
        %v1476 = vsel %vm1448, %v1383, 0.0
        %v1477 = vsel %vm1448, %v1384, 0.0
        %v1478 = vsel %vm1448, %v1385, 0.0
        %v1479 = vsel %vm1448, %v1386, 0.0
        %v1480 = vsel %vm1448, %v1387, 0.0
        %v1481 = vsel %vm1448, %v1388, 0.0
        %v1482 = vsel %vm1449, %v1389, 0.0
        %v1483 = vsel %vm1449, %v1390, 0.0
        %v1484 = vsel %vm1449, %v1391, 0.0
        %v1485 = vsel %vm1449, %v1392, 0.0
        %v1486 = vsel %vm1449, %v1393, 0.0
        %v1487 = vsel %vm1449, %v1394, 0.0
        %v1488 = vsel %vm1449, %v1395, 0.0
        %v1489 = vsel %vm1449, %v1396, 0.0
        %v1490 = vsel %vm1449, %v1397, 0.0
        %v1491 = vsel %vm1449, %v1398, 0.0
        %v1492 = vsel %vm1450, %v1399, 0.0
        %v1493 = vsel %vm1450, %v1400, 0.0
        %v1494 = vsel %vm1450, %v1401, 0.0
        %v1495 = vsel %vm1450, %v1402, 0.0
        %v1496 = vsel %vm1450, %v1403, 0.0
        %v1497 = vsel %vm1450, %v1404, 0.0
        %v1498 = vsel %vm1450, %v1405, 0.0
        %v1499 = vsel %vm1450, %v1406, 0.0
        %v1500 = vsel %vm1450, %v1407, 0.0
        %v1501 = vsel %vm1450, %v1408, 0.0
        %v1502 = vsel %vm1451, %v1409, 0.0
        %v1503 = vsel %vm1451, %v1410, 0.0
        %v1504 = vsel %vm1451, %v1411, 0.0
        %v1505 = vsel %vm1451, %v1412, 0.0
        %v1506 = vsel %vm1451, %v1413, 0.0
        %v1507 = vsel %vm1451, %v1414, 0.0
        %v1508 = vsel %vm1451, %v1415, 0.0
        %v1509 = vsel %vm1451, %v1416, 0.0
        %v1510 = vsel %vm1451, %v1417, 0.0
        %v1511 = vsel %vm1451, %v1418, 0.0
        %v1512 = vld [vmem:[#allocation2] sm:$0xff]
        %v1513 = vld [vmem:[#allocation2 + $0x8] sm:$0x3]
        %v1514 = vadd.f32 %v1452, %v1462
        %v1515 = vadd.f32 %v1514, %v1472
        %v1516 = vadd.f32 %v1515, %v1482
        %v1517 = vadd.f32 %v1516, %v1492
        %v1518 = vadd.f32 %v1517, %v1502
        %v1519 = vrot.slane %v1518, 4
        %v1520 = vadd.f32 %v1518, %v1519
        %v1521 = vrot.slane %v1520, 2
        %v1522 = vadd.f32 %v1520, %v1521
        %v1523 = vrot.slane %v1522, 1
        %v1524 = vadd.f32 %v1522, %v1523
        %v1525 = vadd.f32 %v1453, %v1463
        %v1526 = vadd.f32 %v1525, %v1473
        %v1527 = vadd.f32 %v1526, %v1483
        %v1528 = vadd.f32 %v1527, %v1493
        %v1529 = vadd.f32 %v1528, %v1503
        %v1530 = vrot.slane %v1529, 4
        %v1531 = vadd.f32 %v1529, %v1530
        %v1532 = vrot.slane %v1531, 2
        %v1533 = vadd.f32 %v1531, %v1532
        %v1534 = vrot.slane %v1533, 1
        %v1535 = vadd.f32 %v1533, %v1534
        %v1536 = vadd.f32 %v1454, %v1464
        %v1537 = vadd.f32 %v1536, %v1474
        %v1538 = vadd.f32 %v1537, %v1484
        %v1539 = vadd.f32 %v1538, %v1494
        %v1540 = vadd.f32 %v1539, %v1504
        %v1541 = vrot.slane %v1540, 4
        %v1542 = vadd.f32 %v1540, %v1541
        %v1543 = vrot.slane %v1542, 2
        %v1544 = vadd.f32 %v1542, %v1543
        %v1545 = vrot.slane %v1544, 1
        %v1546 = vadd.f32 %v1544, %v1545
        %v1547 = vadd.f32 %v1455, %v1465
        %v1548 = vadd.f32 %v1547, %v1475
        %v1549 = vadd.f32 %v1548, %v1485
        %v1550 = vadd.f32 %v1549, %v1495
        %v1551 = vadd.f32 %v1550, %v1505
        %v1552 = vrot.slane %v1551, 4
        %v1553 = vadd.f32 %v1551, %v1552
        %v1554 = vrot.slane %v1553, 2
        %v1555 = vadd.f32 %v1553, %v1554
        %v1556 = vrot.slane %v1555, 1
        %v1557 = vadd.f32 %v1555, %v1556
        %v1558 = vadd.f32 %v1456, %v1466
        %v1559 = vadd.f32 %v1558, %v1476
        %v1560 = vadd.f32 %v1559, %v1486
        %v1561 = vadd.f32 %v1560, %v1496
        %v1562 = vadd.f32 %v1561, %v1506
        %v1563 = vrot.slane %v1562, 4
        %v1564 = vadd.f32 %v1562, %v1563
        %v1565 = vrot.slane %v1564, 2
        %v1566 = vadd.f32 %v1564, %v1565
        %v1567 = vrot.slane %v1566, 1
        %v1568 = vadd.f32 %v1566, %v1567
        %v1569 = vadd.f32 %v1457, %v1467
        %v1570 = vadd.f32 %v1569, %v1477
        %v1571 = vadd.f32 %v1570, %v1487
        %v1572 = vadd.f32 %v1571, %v1497
        %v1573 = vadd.f32 %v1572, %v1507
        %v1574 = vrot.slane %v1573, 4
        %v1575 = vadd.f32 %v1573, %v1574
        %v1576 = vrot.slane %v1575, 2
        %v1577 = vadd.f32 %v1575, %v1576
        %v1578 = vrot.slane %v1577, 1
        %v1579 = vadd.f32 %v1577, %v1578
        %v1580 = vadd.f32 %v1458, %v1468
        %v1581 = vadd.f32 %v1580, %v1478
        %v1582 = vadd.f32 %v1581, %v1488
        %v1583 = vadd.f32 %v1582, %v1498
        %v1584 = vadd.f32 %v1583, %v1508
        %v1585 = vrot.slane %v1584, 4
        %v1586 = vadd.f32 %v1584, %v1585
        %v1587 = vrot.slane %v1586, 2
        %v1588 = vadd.f32 %v1586, %v1587
        %v1589 = vrot.slane %v1588, 1
        %v1590 = vadd.f32 %v1588, %v1589
        %v1591 = vadd.f32 %v1459, %v1469
        %v1592 = vadd.f32 %v1591, %v1479
        %v1593 = vadd.f32 %v1592, %v1489
        %v1594 = vadd.f32 %v1593, %v1499
        %v1595 = vadd.f32 %v1594, %v1509
        %v1596 = vrot.slane %v1595, 4
        %v1597 = vadd.f32 %v1595, %v1596
        %v1598 = vrot.slane %v1597, 2
        %v1599 = vadd.f32 %v1597, %v1598
        %v1600 = vrot.slane %v1599, 1
        %v1601 = vadd.f32 %v1599, %v1600
        %v1602 = vadd.f32 %v1460, %v1470
        %v1603 = vadd.f32 %v1602, %v1480
        %v1604 = vadd.f32 %v1603, %v1490
        %v1605 = vadd.f32 %v1604, %v1500
        %v1606 = vadd.f32 %v1605, %v1510
        %v1607 = vrot.slane %v1606, 4
        %v1608 = vadd.f32 %v1606, %v1607
        %v1609 = vrot.slane %v1608, 2
        %v1610 = vadd.f32 %v1608, %v1609
        %v1611 = vrot.slane %v1610, 1
        %v1612 = vadd.f32 %v1610, %v1611
        %v1613 = vadd.f32 %v1461, %v1471
        %v1614 = vadd.f32 %v1613, %v1481
        %v1615 = vadd.f32 %v1614, %v1491
        %v1616 = vadd.f32 %v1615, %v1501
        %v1617 = vadd.f32 %v1616, %v1511
        %v1618 = vrot.slane %v1617, 4
        %v1619 = vadd.f32 %v1617, %v1618
        %v1620 = vrot.slane %v1619, 2
        %v1621 = vadd.f32 %v1619, %v1620
        %v1622 = vrot.slane %v1621, 1
        %v1623 = vadd.f32 %v1621, %v1622
        %v1634 = vcombine.low %v1524, %v1535
        %v1635 = vcombine.low %v1546, %v1557
        %v1636 = vcombine.low %v1568, %v1579
        %v1637 = vcombine.low %v1590, %v1601
        %v1639 = vunpack.c.l.s4 1966171168
        %v1640 = vunpack.c.0.s8 %v1639
        %v1641 = vlaneseq
        %v1642 = vshrl.u32 %v1641, 7
        %v1643 = vsub.s32 %v1640, %v1642
        %v1644 = vrot.slane %v1634, %v1643
        %v1646 = vunpack.c.l.s4 1966171168
        %v1647 = vunpack.c.0.s8 %v1646
        %v1648 = vlaneseq
        %v1649 = vshrl.u32 %v1648, 7
        %v1650 = vsub.s32 %v1647, %v1649
        %v1651 = vrot.slane %v1635, %v1650
        %v1653 = vunpack.c.l.s4 1966171168
        %v1654 = vunpack.c.0.s8 %v1653
        %v1655 = vlaneseq
        %v1656 = vshrl.u32 %v1655, 7
        %v1657 = vsub.s32 %v1654, %v1656
        %v1658 = vrot.slane %v1636, %v1657
        %v1660 = vunpack.c.l.s4 1966171168
        %v1661 = vunpack.c.0.s8 %v1660
        %v1662 = vlaneseq
        %v1663 = vshrl.u32 %v1662, 7
        %v1664 = vsub.s32 %v1661, %v1663
        %v1665 = vrot.slane %v1637, %v1664
        %v1666 = vcombine.low %v1644, %v1651
        %v1667 = vcombine.low %v1658, %v1665
        %v1669 = vunpack.c.l.s4 1966171168
        %v1670 = vunpack.c.0.s8 %v1669
        %v1671 = vlaneseq
        %v1672 = vshrl.u32 %v1671, 7
        %v1673 = vsub.s32 %v1670, %v1672
        %v1674 = vrot.slane %v1666, %v1673
        %v1676 = vunpack.c.l.s4 1966171168
        %v1677 = vunpack.c.0.s8 %v1676
        %v1678 = vlaneseq
        %v1679 = vshrl.u32 %v1678, 7
        %v1680 = vsub.s32 %v1677, %v1679
        %v1681 = vrot.slane %v1667, %v1680
        %v1682 = vcombine.low %v1674, %v1681
        %v1683 = vcombine.low %v1612, %v1623
        %v1685 = vunpack.c.l.s4 1966171168
        %v1686 = vunpack.c.0.s8 %v1685
        %v1687 = vlaneseq
        %v1688 = vshrl.u32 %v1687, 7
        %v1689 = vsub.s32 %v1686, %v1688
        %v1690 = vrot.slane %v1683, %v1689
        %v1692 = vunpack.c.l.s4 1966171168
        %v1693 = vunpack.c.0.s8 %v1692
        %v1694 = vlaneseq
        %v1695 = vshrl.u32 %v1694, 7
        %v1696 = vsub.s32 %v1693, %v1695
        %v1697 = vrot.slane %v1690, %v1696
        %v1700 = vadd.f32 %v1512, %v1682
        %v1701 = vadd.f32 %v1513, %v1697
        %1702 = vst [vmem:[#allocation2] sm:$0xff] %v1700
        %v1703 = vlaneseq
        %vm1704 = vcmp.ge.s32.totalorder %v1703, 0
        %vm1705 = vcmp.lt.s32.totalorder %v1703, 256
        %vm1706 = vmand %vm1704, %vm1705
        %1707 = vst.msk [vmem:[#allocation2 + $0x8] sm:$0x3] %vm1706, %v1701
        %p1708 = scmp.eq.s32.totalorder %s28, 1
        // Predicated region
        $region61: #{tpu_custom_call.1} parent=47 // pred_check
          %p1709 = pneg %p1708
        $region62: #{tpu_custom_call.1} parent=47 // pred_check_branch
          %1711 = sbr.rel (%p1709) target = $region64
        $region63: #{tpu_custom_call.1} parent=47 // pred_region
          %v1712 = vld [vmem:[#allocation2] sm:$0xff]
          %v1713 = vld [vmem:[#allocation2 + $0x8] sm:$0x3]
          %v1714 = vmul.f32 %v1712, 0.015625
          %v1715 = vmul.f32 %v1713, 0.015625
          %v1718 = vlaneseq
          %v1719 = vshrl.u32 %v1718, 7
          %v1720 = vsub.s32 0, %v1719
          %v1721 = vrot.slane %v1714, %v1720
          %v1722 = vlaneseq
          %v1723 = vshrl.u32 %v1722, 7
          %v1724 = vsub.s32 1, %v1723
          %v1725 = vrot.slane %v1714, %v1724
          %v1726 = vlaneseq
          %v1727 = vshrl.u32 %v1726, 7
          %v1728 = vsub.s32 2, %v1727
          %v1729 = vrot.slane %v1714, %v1728
          %v1730 = vlaneseq
          %v1731 = vshrl.u32 %v1730, 7
          %v1732 = vsub.s32 3, %v1731
          %v1733 = vrot.slane %v1714, %v1732
          %v1734 = vlaneseq
          %v1735 = vshrl.u32 %v1734, 7
          %v1736 = vsub.s32 4, %v1735
          %v1737 = vrot.slane %v1714, %v1736
          %v1738 = vlaneseq
          %v1739 = vshrl.u32 %v1738, 7
          %v1740 = vsub.s32 5, %v1739
          %v1741 = vrot.slane %v1714, %v1740
          %v1742 = vlaneseq
          %v1743 = vshrl.u32 %v1742, 7
          %v1744 = vsub.s32 6, %v1743
          %v1745 = vrot.slane %v1714, %v1744
          %v1746 = vlaneseq
          %v1747 = vshrl.u32 %v1746, 7
          %v1748 = vsub.s32 7, %v1747
          %v1749 = vrot.slane %v1714, %v1748
          %v1750 = vlaneseq
          %v1751 = vshrl.u32 %v1750, 7
          %v1752 = vsub.s32 0, %v1751
          %v1753 = vrot.slane %v1715, %v1752
          %v1754 = vlaneseq
          %v1755 = vshrl.u32 %v1754, 7
          %v1756 = vsub.s32 1, %v1755
          %v1757 = vrot.slane %v1715, %v1756
          %v1768 = vpack.c.bf16 %v1721, %v1721
          %v1769 = vpack.c.bf16 %v1725, %v1725
          %v1770 = vpack.c.bf16 %v1729, %v1729
          %v1771 = vpack.c.bf16 %v1733, %v1733
          %v1772 = vpack.c.bf16 %v1737, %v1737
          %v1773 = vpack.c.bf16 %v1741, %v1741
          %v1774 = vpack.c.bf16 %v1745, %v1745
          %v1775 = vpack.c.bf16 %v1749, %v1749
          %v1776 = vpack.c.bf16 %v1753, %v1753
          %v1777 = vpack.c.bf16 %v1757, %v1757
          %v1778 = vld [vmem:[#allocation6] sm:$0xf]
          %v1779 = vld [vmem:[#allocation6 + $0x4] sm:$0xf]
          %v1780 = vld [vmem:[#allocation6 + $0x8] sm:$0xf]
          %v1781 = vld [vmem:[#allocation6 + $0xc] sm:$0xf]
          %v1782 = vld [vmem:[#allocation6 + $0x10] sm:$0xf]
          %v1783 = vld [vmem:[#allocation6 + $0x14] sm:$0xf]
          %v1784 = vld [vmem:[#allocation6 + $0x18] sm:$0xf]
          %v1785 = vld [vmem:[#allocation6 + $0x1c] sm:$0xf]
          %v1786 = vld [vmem:[#allocation6 + $0x20] sm:$0xf]
          %v1787 = vld [vmem:[#allocation6 + $0x24] sm:$0xf]
          %v1788 = vld [vmem:[#allocation6 + $0x28] sm:$0xf]
          %v1789 = vld [vmem:[#allocation6 + $0x2c] sm:$0xf]
          %v1790 = vld [vmem:[#allocation6 + $0x30] sm:$0xf]
          %v1791 = vld [vmem:[#allocation6 + $0x34] sm:$0xf]
          %v1792 = vld [vmem:[#allocation6 + $0x38] sm:$0xf]
          %v1793 = vld [vmem:[#allocation6 + $0x3c] sm:$0xf]
          %v1794 = vld [vmem:[#allocation6 + $0x40] sm:$0xf]
          %v1795 = vld [vmem:[#allocation6 + $0x44] sm:$0xf]
          %v1796 = vld [vmem:[#allocation6 + $0x48] sm:$0xf]
          %v1797 = vld [vmem:[#allocation6 + $0x4c] sm:$0xf]
          %v1798 = vld [vmem:[#allocation6 + $0x50] sm:$0xf]
          %v1799 = vld [vmem:[#allocation6 + $0x54] sm:$0xf]
          %v1800 = vld [vmem:[#allocation6 + $0x58] sm:$0xf]
          %v1801 = vld [vmem:[#allocation6 + $0x5c] sm:$0xf]
          %v1802 = vld [vmem:[#allocation6 + $0x60] sm:$0xf]
          %v1803 = vld [vmem:[#allocation6 + $0x64] sm:$0xf]
          %v1804 = vld [vmem:[#allocation6 + $0x68] sm:$0xf]
          %v1805 = vld [vmem:[#allocation6 + $0x6c] sm:$0xf]
          %v1806 = vld [vmem:[#allocation6 + $0x70] sm:$0xf]
          %v1807 = vld [vmem:[#allocation6 + $0x74] sm:$0xf]
          %v1808 = vld [vmem:[#allocation6 + $0x78] sm:$0xf]
          %v1809 = vld [vmem:[#allocation6 + $0x7c] sm:$0xf]
          %v1810 = vld [vmem:[#allocation6 + $0x80] sm:$0xf]
          %v1811 = vld [vmem:[#allocation6 + $0x84] sm:$0xf]
          %v1812 = vld [vmem:[#allocation6 + $0x88] sm:$0xf]
          %v1813 = vld [vmem:[#allocation6 + $0x8c] sm:$0xf]
          %v1814 = vld [vmem:[#allocation6 + $0x90] sm:$0xf]
          %v1815 = vld [vmem:[#allocation6 + $0x94] sm:$0xf]
          %v1816 = vld [vmem:[#allocation6 + $0x98] sm:$0xf]
          %v1817 = vld [vmem:[#allocation6 + $0x9c] sm:$0xf]
          %v1818 = vld [vmem:[#allocation6 + $0xa0] sm:$0xf]
          %v1819 = vld [vmem:[#allocation6 + $0xa4] sm:$0xf]
          %v1820 = vld [vmem:[#allocation6 + $0xa8] sm:$0xf]
          %v1821 = vld [vmem:[#allocation6 + $0xac] sm:$0xf]
          %v1822 = vld [vmem:[#allocation6 + $0xb0] sm:$0xf]
          %v1823 = vld [vmem:[#allocation6 + $0xb4] sm:$0xf]
          %v1824 = vld [vmem:[#allocation6 + $0xb8] sm:$0xf]
          %v1825 = vld [vmem:[#allocation6 + $0xbc] sm:$0xf]
          %v1826 = vld [vmem:[#allocation6 + $0xc0] sm:$0xf]
          %v1827 = vld [vmem:[#allocation6 + $0xc4] sm:$0xf]
          %v1828 = vld [vmem:[#allocation6 + $0xc8] sm:$0xf]
          %v1829 = vld [vmem:[#allocation6 + $0xcc] sm:$0xf]
          %v1830 = vld [vmem:[#allocation6 + $0xd0] sm:$0xf]
          %v1831 = vld [vmem:[#allocation6 + $0xd4] sm:$0xf]
          %v1832 = vld [vmem:[#allocation6 + $0xd8] sm:$0xf]
          %v1833 = vld [vmem:[#allocation6 + $0xdc] sm:$0xf]
          %v1834 = vld [vmem:[#allocation6 + $0xe0] sm:$0xf]
          %v1835 = vld [vmem:[#allocation6 + $0xe4] sm:$0xf]
          %v1836 = vld [vmem:[#allocation6 + $0xe8] sm:$0xf]
          %v1837 = vld [vmem:[#allocation6 + $0xec] sm:$0xf]
          %v1838 = vld [vmem:[#allocation6 + $0xf0] sm:$0xf]
          %v1839 = vld [vmem:[#allocation6 + $0xf4] sm:$0xf]
          %v1840 = vld [vmem:[#allocation6 + $0xf8] sm:$0xf]
          %v1841 = vld [vmem:[#allocation6 + $0xfc] sm:$0xf]
          %v1842 = vld [vmem:[#allocation6 + $0x100] sm:$0xf]
          %v1843 = vld [vmem:[#allocation6 + $0x104] sm:$0xf]
          %v1844 = vld [vmem:[#allocation6 + $0x108] sm:$0xf]
          %v1845 = vld [vmem:[#allocation6 + $0x10c] sm:$0xf]
          %v1846 = vld [vmem:[#allocation6 + $0x110] sm:$0xf]
          %v1847 = vld [vmem:[#allocation6 + $0x114] sm:$0xf]
          %v1848 = vld [vmem:[#allocation6 + $0x118] sm:$0xf]
          %v1849 = vld [vmem:[#allocation6 + $0x11c] sm:$0xf]
          %v1850 = vld [vmem:[#allocation6 + $0x120] sm:$0xf]
          %v1851 = vld [vmem:[#allocation6 + $0x124] sm:$0xf]
          %v1852 = vld [vmem:[#allocation6 + $0x128] sm:$0xf]
          %v1853 = vld [vmem:[#allocation6 + $0x12c] sm:$0xf]
          %v1854 = vld [vmem:[#allocation6 + $0x130] sm:$0xf]
          %v1855 = vld [vmem:[#allocation6 + $0x134] sm:$0xf]
          %v1856 = vld [vmem:[#allocation6 + $0x138] sm:$0xf]
          %v1857 = vld [vmem:[#allocation6 + $0x13c] sm:$0xf]
          %v1858 = vld [vmem:[#allocation6 + $0x140] sm:$0xf]
          %v1859 = vld [vmem:[#allocation6 + $0x144] sm:$0xf]
          %v1860 = vld [vmem:[#allocation6 + $0x148] sm:$0xf]
          %v1861 = vld [vmem:[#allocation6 + $0x14c] sm:$0xf]
          %v1862 = vld [vmem:[#allocation6 + $0x150] sm:$0xf]
          %v1863 = vld [vmem:[#allocation6 + $0x154] sm:$0xf]
          %v1864 = vld [vmem:[#allocation6 + $0x158] sm:$0xf]
          %v1865 = vld [vmem:[#allocation6 + $0x15c] sm:$0xf]
          %v1866 = vld [vmem:[#allocation6 + $0x160] sm:$0xf]
          %v1867 = vld [vmem:[#allocation6 + $0x164] sm:$0xf]
          %v1868 = vld [vmem:[#allocation6 + $0x168] sm:$0xf]
          %v1869 = vld [vmem:[#allocation6 + $0x16c] sm:$0xf]
          %v1870 = vld [vmem:[#allocation6 + $0x170] sm:$0xf]
          %v1871 = vld [vmem:[#allocation6 + $0x174] sm:$0xf]
          %v1872 = vld [vmem:[#allocation6 + $0x178] sm:$0xf]
          %v1873 = vld [vmem:[#allocation6 + $0x17c] sm:$0xf]
          %v1874 = vld [vmem:[#allocation6 + $0x180] sm:$0xf]
          %v1875 = vld [vmem:[#allocation6 + $0x184] sm:$0xf]
          %v1876 = vld [vmem:[#allocation6 + $0x188] sm:$0xf]
          %v1877 = vld [vmem:[#allocation6 + $0x18c] sm:$0xf]
          %v1878 = vld [vmem:[#allocation6 + $0x190] sm:$0xf]
          %v1879 = vld [vmem:[#allocation6 + $0x194] sm:$0xf]
          %v1880 = vld [vmem:[#allocation6 + $0x198] sm:$0xf]
          %v1881 = vld [vmem:[#allocation6 + $0x19c] sm:$0xf]
          %v1882 = vld [vmem:[#allocation6 + $0x1a0] sm:$0xf]
          %v1883 = vld [vmem:[#allocation6 + $0x1a4] sm:$0xf]
          %v1884 = vld [vmem:[#allocation6 + $0x1a8] sm:$0xf]
          %v1885 = vld [vmem:[#allocation6 + $0x1ac] sm:$0xf]
          %v1886 = vld [vmem:[#allocation6 + $0x1b0] sm:$0xf]
          %v1887 = vld [vmem:[#allocation6 + $0x1b4] sm:$0xf]
          %v1888 = vld [vmem:[#allocation6 + $0x1b8] sm:$0xf]
          %v1889 = vld [vmem:[#allocation6 + $0x1bc] sm:$0xf]
          %v1890 = vld [vmem:[#allocation6 + $0x1c0] sm:$0xf]
          %v1891 = vld [vmem:[#allocation6 + $0x1c4] sm:$0xf]
          %v1892 = vld [vmem:[#allocation6 + $0x1c8] sm:$0xf]
          %v1893 = vld [vmem:[#allocation6 + $0x1cc] sm:$0xf]
          %v1894 = vld [vmem:[#allocation6 + $0x1d0] sm:$0xf]
          %v1895 = vld [vmem:[#allocation6 + $0x1d4] sm:$0xf]
          %v1896 = vld [vmem:[#allocation6 + $0x1d8] sm:$0xf]
          %v1897 = vld [vmem:[#allocation6 + $0x1dc] sm:$0xf]
          %v1898 = vld [vmem:[#allocation6 + $0x1e0] sm:$0xf]
          %v1899 = vld [vmem:[#allocation6 + $0x1e4] sm:$0xf]
          %v1900 = vld [vmem:[#allocation6 + $0x1e8] sm:$0xf]
          %v1901 = vld [vmem:[#allocation6 + $0x1ec] sm:$0xf]
          %v1902 = vld [vmem:[#allocation6 + $0x1f0] sm:$0xf]
          %v1903 = vld [vmem:[#allocation6 + $0x1f4] sm:$0xf]
          %v1904 = vld [vmem:[#allocation6 + $0x1f8] sm:$0xf]
          %v1905 = vld [vmem:[#allocation6 + $0x1fc] sm:$0xf]
          %v1906 = vld [vmem:[#allocation6 + $0x200] sm:$0xf]
          %v1907 = vld [vmem:[#allocation6 + $0x204] sm:$0xf]
          %v1908 = vld [vmem:[#allocation6 + $0x208] sm:$0xf]
          %v1909 = vld [vmem:[#allocation6 + $0x20c] sm:$0xf]
          %v1910 = vld [vmem:[#allocation6 + $0x210] sm:$0xf]
          %v1911 = vld [vmem:[#allocation6 + $0x214] sm:$0xf]
          %v1912 = vld [vmem:[#allocation6 + $0x218] sm:$0xf]
          %v1913 = vld [vmem:[#allocation6 + $0x21c] sm:$0xf]
          %v1914 = vld [vmem:[#allocation6 + $0x220] sm:$0xf]
          %v1915 = vld [vmem:[#allocation6 + $0x224] sm:$0xf]
          %v1916 = vld [vmem:[#allocation6 + $0x228] sm:$0xf]
          %v1917 = vld [vmem:[#allocation6 + $0x22c] sm:$0xf]
          %v1918 = vld [vmem:[#allocation6 + $0x230] sm:$0xf]
          %v1919 = vld [vmem:[#allocation6 + $0x234] sm:$0xf]
          %v1920 = vld [vmem:[#allocation6 + $0x238] sm:$0xf]
          %v1921 = vld [vmem:[#allocation6 + $0x23c] sm:$0xf]
          %v1922 = vld [vmem:[#allocation6 + $0x240] sm:$0xf]
          %v1923 = vld [vmem:[#allocation6 + $0x244] sm:$0xf]
          %v1924 = vld [vmem:[#allocation6 + $0x248] sm:$0xf]
          %v1925 = vld [vmem:[#allocation6 + $0x24c] sm:$0xf]
          %v1926 = vld [vmem:[#allocation6 + $0x250] sm:$0xf]
          %v1927 = vld [vmem:[#allocation6 + $0x254] sm:$0xf]
          %v1928 = vld [vmem:[#allocation6 + $0x258] sm:$0xf]
          %v1929 = vld [vmem:[#allocation6 + $0x25c] sm:$0xf]
          %v1930 = vld [vmem:[#allocation6 + $0x260] sm:$0xf]
          %v1931 = vld [vmem:[#allocation6 + $0x264] sm:$0xf]
          %v1932 = vld [vmem:[#allocation6 + $0x268] sm:$0xf]
          %v1933 = vld [vmem:[#allocation6 + $0x26c] sm:$0xf]
          %v1934 = vld [vmem:[#allocation6 + $0x270] sm:$0xf]
          %v1935 = vld [vmem:[#allocation6 + $0x274] sm:$0xf]
          %v1936 = vld [vmem:[#allocation6 + $0x278] sm:$0xf]
          %v1937 = vld [vmem:[#allocation6 + $0x27c] sm:$0xf]
          %v1938 = vld [vmem:[%s6] sm:$0x1]
          %v2099 = vunpack.c.l.b16 %v1778
          %v2100 = vunpack.c.l.b16 %v1779
          %v2101 = vunpack.c.l.b16 %v1780
          %v2102 = vunpack.c.l.b16 %v1781
          %v2103 = vunpack.c.l.b16 %v1782
          %v2104 = vunpack.c.l.b16 %v1783
          %v2105 = vunpack.c.l.b16 %v1784
          %v2106 = vunpack.c.l.b16 %v1785
          %v2107 = vunpack.c.l.b16 %v1786
          %v2108 = vunpack.c.l.b16 %v1787
          %v2109 = vunpack.c.l.b16 %v1788
          %v2110 = vunpack.c.l.b16 %v1789
          %v2111 = vunpack.c.l.b16 %v1790
          %v2112 = vunpack.c.l.b16 %v1791
          %v2113 = vunpack.c.l.b16 %v1792
          %v2114 = vunpack.c.l.b16 %v1793
          %v2115 = vunpack.c.l.b16 %v1794
          %v2116 = vunpack.c.l.b16 %v1795
          %v2117 = vunpack.c.l.b16 %v1796
          %v2118 = vunpack.c.l.b16 %v1797
          %v2119 = vunpack.c.l.b16 %v1798
          %v2120 = vunpack.c.l.b16 %v1799
          %v2121 = vunpack.c.l.b16 %v1800
          %v2122 = vunpack.c.l.b16 %v1801
          %v2123 = vunpack.c.l.b16 %v1802
          %v2124 = vunpack.c.l.b16 %v1803
          %v2125 = vunpack.c.l.b16 %v1804
          %v2126 = vunpack.c.l.b16 %v1805
          %v2127 = vunpack.c.l.b16 %v1806
          %v2128 = vunpack.c.l.b16 %v1807
          %v2129 = vunpack.c.l.b16 %v1808
          %v2130 = vunpack.c.l.b16 %v1809
          %v2131 = vunpack.c.l.b16 %v1810
          %v2132 = vunpack.c.l.b16 %v1811
          %v2133 = vunpack.c.l.b16 %v1812
          %v2134 = vunpack.c.l.b16 %v1813
          %v2135 = vunpack.c.l.b16 %v1814
          %v2136 = vunpack.c.l.b16 %v1815
          %v2137 = vunpack.c.l.b16 %v1816
          %v2138 = vunpack.c.l.b16 %v1817
          %v2139 = vunpack.c.l.b16 %v1818
          %v2140 = vunpack.c.l.b16 %v1819
          %v2141 = vunpack.c.l.b16 %v1820
          %v2142 = vunpack.c.l.b16 %v1821
          %v2143 = vunpack.c.l.b16 %v1822
          %v2144 = vunpack.c.l.b16 %v1823
          %v2145 = vunpack.c.l.b16 %v1824
          %v2146 = vunpack.c.l.b16 %v1825
          %v2147 = vunpack.c.l.b16 %v1826
          %v2148 = vunpack.c.l.b16 %v1827
          %v2149 = vunpack.c.l.b16 %v1828
          %v2150 = vunpack.c.l.b16 %v1829
          %v2151 = vunpack.c.l.b16 %v1830
          %v2152 = vunpack.c.l.b16 %v1831
          %v2153 = vunpack.c.l.b16 %v1832
          %v2154 = vunpack.c.l.b16 %v1833
          %v2155 = vunpack.c.l.b16 %v1834
          %v2156 = vunpack.c.l.b16 %v1835
          %v2157 = vunpack.c.l.b16 %v1836
          %v2158 = vunpack.c.l.b16 %v1837
          %v2159 = vunpack.c.l.b16 %v1838
          %v2160 = vunpack.c.l.b16 %v1839
          %v2161 = vunpack.c.l.b16 %v1840
          %v2162 = vunpack.c.l.b16 %v1841
          %v2163 = vunpack.c.l.b16 %v1842
          %v2164 = vunpack.c.l.b16 %v1843
          %v2165 = vunpack.c.l.b16 %v1844
          %v2166 = vunpack.c.l.b16 %v1845
          %v2167 = vunpack.c.l.b16 %v1846
          %v2168 = vunpack.c.l.b16 %v1847
          %v2169 = vunpack.c.l.b16 %v1848
          %v2170 = vunpack.c.l.b16 %v1849
          %v2171 = vunpack.c.l.b16 %v1850
          %v2172 = vunpack.c.l.b16 %v1851
          %v2173 = vunpack.c.l.b16 %v1852
          %v2174 = vunpack.c.l.b16 %v1853
          %v2175 = vunpack.c.l.b16 %v1854
          %v2176 = vunpack.c.l.b16 %v1855
          %v2177 = vunpack.c.l.b16 %v1856
          %v2178 = vunpack.c.l.b16 %v1857
          %v2179 = vunpack.c.l.b16 %v1858
          %v2180 = vunpack.c.l.b16 %v1859
          %v2181 = vunpack.c.l.b16 %v1860
          %v2182 = vunpack.c.l.b16 %v1861
          %v2183 = vunpack.c.l.b16 %v1862
          %v2184 = vunpack.c.l.b16 %v1863
          %v2185 = vunpack.c.l.b16 %v1864
          %v2186 = vunpack.c.l.b16 %v1865
          %v2187 = vunpack.c.l.b16 %v1866
          %v2188 = vunpack.c.l.b16 %v1867
          %v2189 = vunpack.c.l.b16 %v1868
          %v2190 = vunpack.c.l.b16 %v1869
          %v2191 = vunpack.c.l.b16 %v1870
          %v2192 = vunpack.c.l.b16 %v1871
          %v2193 = vunpack.c.l.b16 %v1872
          %v2194 = vunpack.c.l.b16 %v1873
          %v2195 = vunpack.c.l.b16 %v1874
          %v2196 = vunpack.c.l.b16 %v1875
          %v2197 = vunpack.c.l.b16 %v1876
          %v2198 = vunpack.c.l.b16 %v1877
          %v2199 = vunpack.c.l.b16 %v1878
          %v2200 = vunpack.c.l.b16 %v1879
          %v2201 = vunpack.c.l.b16 %v1880
          %v2202 = vunpack.c.l.b16 %v1881
          %v2203 = vunpack.c.l.b16 %v1882
          %v2204 = vunpack.c.l.b16 %v1883
          %v2205 = vunpack.c.l.b16 %v1884
          %v2206 = vunpack.c.l.b16 %v1885
          %v2207 = vunpack.c.l.b16 %v1886
          %v2208 = vunpack.c.l.b16 %v1887
          %v2209 = vunpack.c.l.b16 %v1888
          %v2210 = vunpack.c.l.b16 %v1889
          %v2211 = vunpack.c.l.b16 %v1890
          %v2212 = vunpack.c.l.b16 %v1891
          %v2213 = vunpack.c.l.b16 %v1892
          %v2214 = vunpack.c.l.b16 %v1893
          %v2215 = vunpack.c.l.b16 %v1894
          %v2216 = vunpack.c.l.b16 %v1895
          %v2217 = vunpack.c.l.b16 %v1896
          %v2218 = vunpack.c.l.b16 %v1897
          %v2219 = vunpack.c.l.b16 %v1898
          %v2220 = vunpack.c.l.b16 %v1899
          %v2221 = vunpack.c.l.b16 %v1900
          %v2222 = vunpack.c.l.b16 %v1901
          %v2223 = vunpack.c.l.b16 %v1902
          %v2224 = vunpack.c.l.b16 %v1903
          %v2225 = vunpack.c.l.b16 %v1904
          %v2226 = vunpack.c.l.b16 %v1905
          %v2227 = vunpack.c.l.b16 %v1906
          %v2228 = vunpack.c.l.b16 %v1907
          %v2229 = vunpack.c.l.b16 %v1908
          %v2230 = vunpack.c.l.b16 %v1909
          %v2231 = vunpack.c.l.b16 %v1910
          %v2232 = vunpack.c.l.b16 %v1911
          %v2233 = vunpack.c.l.b16 %v1912
          %v2234 = vunpack.c.l.b16 %v1913
          %v2235 = vunpack.c.l.b16 %v1914
          %v2236 = vunpack.c.l.b16 %v1915
          %v2237 = vunpack.c.l.b16 %v1916
          %v2238 = vunpack.c.l.b16 %v1917
          %v2239 = vunpack.c.l.b16 %v1918
          %v2240 = vunpack.c.l.b16 %v1919
          %v2241 = vunpack.c.l.b16 %v1920
          %v2242 = vunpack.c.l.b16 %v1921
          %v2243 = vunpack.c.l.b16 %v1922
          %v2244 = vunpack.c.l.b16 %v1923
          %v2245 = vunpack.c.l.b16 %v1924
          %v2246 = vunpack.c.l.b16 %v1925
          %v2247 = vunpack.c.l.b16 %v1926
          %v2248 = vunpack.c.l.b16 %v1927
          %v2249 = vunpack.c.l.b16 %v1928
          %v2250 = vunpack.c.l.b16 %v1929
          %v2251 = vunpack.c.l.b16 %v1930
          %v2252 = vunpack.c.l.b16 %v1931
          %v2253 = vunpack.c.l.b16 %v1932
          %v2254 = vunpack.c.l.b16 %v1933
          %v2255 = vunpack.c.l.b16 %v1934
          %v2256 = vunpack.c.l.b16 %v1935
          %v2257 = vunpack.c.l.b16 %v1936
          %v2258 = vunpack.c.l.b16 %v1937
          %v2259 = vpack.c.b16 %v2100, %v2099
          %v2260 = vpack.c.b16 %v2102, %v2101
          %v2261 = vpack.c.b16 %v2104, %v2103
          %v2262 = vpack.c.b16 %v2106, %v2105
          %v2263 = vpack.c.b16 %v2108, %v2107
          %v2264 = vpack.c.b16 %v2110, %v2109
          %v2265 = vpack.c.b16 %v2112, %v2111
          %v2266 = vpack.c.b16 %v2114, %v2113
          %v2267 = vpack.c.b16 %v2116, %v2115
          %v2268 = vpack.c.b16 %v2118, %v2117
          %v2269 = vpack.c.b16 %v2120, %v2119
          %v2270 = vpack.c.b16 %v2122, %v2121
          %v2271 = vpack.c.b16 %v2124, %v2123
          %v2272 = vpack.c.b16 %v2126, %v2125
          %v2273 = vpack.c.b16 %v2128, %v2127
          %v2274 = vpack.c.b16 %v2130, %v2129
          %v2275 = vpack.c.b16 %v2132, %v2131
          %v2276 = vpack.c.b16 %v2134, %v2133
          %v2277 = vpack.c.b16 %v2136, %v2135
          %v2278 = vpack.c.b16 %v2138, %v2137
          %v2279 = vpack.c.b16 %v2140, %v2139
          %v2280 = vpack.c.b16 %v2142, %v2141
          %v2281 = vpack.c.b16 %v2144, %v2143
          %v2282 = vpack.c.b16 %v2146, %v2145
          %v2283 = vpack.c.b16 %v2148, %v2147
          %v2284 = vpack.c.b16 %v2150, %v2149
          %v2285 = vpack.c.b16 %v2152, %v2151
          %v2286 = vpack.c.b16 %v2154, %v2153
          %v2287 = vpack.c.b16 %v2156, %v2155
          %v2288 = vpack.c.b16 %v2158, %v2157
          %v2289 = vpack.c.b16 %v2160, %v2159
          %v2290 = vpack.c.b16 %v2162, %v2161
          %v2291 = vpack.c.b16 %v2164, %v2163
          %v2292 = vpack.c.b16 %v2166, %v2165
          %v2293 = vpack.c.b16 %v2168, %v2167
          %v2294 = vpack.c.b16 %v2170, %v2169
          %v2295 = vpack.c.b16 %v2172, %v2171
          %v2296 = vpack.c.b16 %v2174, %v2173
          %v2297 = vpack.c.b16 %v2176, %v2175
          %v2298 = vpack.c.b16 %v2178, %v2177
          %v2299 = vpack.c.b16 %v2180, %v2179
          %v2300 = vpack.c.b16 %v2182, %v2181
          %v2301 = vpack.c.b16 %v2184, %v2183
          %v2302 = vpack.c.b16 %v2186, %v2185
          %v2303 = vpack.c.b16 %v2188, %v2187
          %v2304 = vpack.c.b16 %v2190, %v2189
          %v2305 = vpack.c.b16 %v2192, %v2191
          %v2306 = vpack.c.b16 %v2194, %v2193
          %v2307 = vpack.c.b16 %v2196, %v2195
          %v2308 = vpack.c.b16 %v2198, %v2197
          %v2309 = vpack.c.b16 %v2200, %v2199
          %v2310 = vpack.c.b16 %v2202, %v2201
          %v2311 = vpack.c.b16 %v2204, %v2203
          %v2312 = vpack.c.b16 %v2206, %v2205
          %v2313 = vpack.c.b16 %v2208, %v2207
          %v2314 = vpack.c.b16 %v2210, %v2209
          %v2315 = vpack.c.b16 %v2212, %v2211
          %v2316 = vpack.c.b16 %v2214, %v2213
          %v2317 = vpack.c.b16 %v2216, %v2215
          %v2318 = vpack.c.b16 %v2218, %v2217
          %v2319 = vpack.c.b16 %v2220, %v2219
          %v2320 = vpack.c.b16 %v2222, %v2221
          %v2321 = vpack.c.b16 %v2224, %v2223
          %v2322 = vpack.c.b16 %v2226, %v2225
          %v2323 = vpack.c.b16 %v2228, %v2227
          %v2324 = vpack.c.b16 %v2230, %v2229
          %v2325 = vpack.c.b16 %v2232, %v2231
          %v2326 = vpack.c.b16 %v2234, %v2233
          %v2327 = vpack.c.b16 %v2236, %v2235
          %v2328 = vpack.c.b16 %v2238, %v2237
          %v2329 = vpack.c.b16 %v2240, %v2239
          %v2330 = vpack.c.b16 %v2242, %v2241
          %v2331 = vpack.c.b16 %v2244, %v2243
          %v2332 = vpack.c.b16 %v2246, %v2245
          %v2333 = vpack.c.b16 %v2248, %v2247
          %v2334 = vpack.c.b16 %v2250, %v2249
          %v2335 = vpack.c.b16 %v2252, %v2251
          %v2336 = vpack.c.b16 %v2254, %v2253
          %v2337 = vpack.c.b16 %v2256, %v2255
          %v2338 = vpack.c.b16 %v2258, %v2257
          %2419 = vmatprep.subr.bf16.mxu0 0
          %2420 = vmatpush1.bf16.msra.mxu0 %v2259
          %2421 = vmatprep.subr.bf16.mxu0 0
          %2422 = vmatpush1.bf16.msra.mxu0 %v2260
          %2423 = vmatprep.subr.bf16.mxu0 0
          %2424 = vmatpush1.bf16.msra.mxu0 %v2261
          %2425 = vmatprep.subr.bf16.mxu0 0
          %2426 = vmatpush1.bf16.msra.mxu0 %v2262
          %2427 = vmatprep.subr.bf16.mxu0 0
          %2428 = vmatpush1.bf16.msra.mxu0 %v2263
          %2429 = vmatprep.subr.bf16.mxu0 0
          %2430 = vmatpush1.bf16.msra.mxu0 %v2264
          %2431 = vmatprep.subr.bf16.mxu0 0
          %2432 = vmatpush1.bf16.msra.mxu0 %v2265
          %2433 = vmatprep.subr.bf16.mxu0 0
          %2434 = vmatpush1.bf16.msra.mxu0 %v2266
          %2435 = vmatprep.subr.bf16.mxu0 0
          %2436 = vmatpush1.bf16.msra.mxu0 %v2267
          %2437 = vmatprep.subr.bf16.mxu0 0
          %2438 = vmatpush1.bf16.msra.mxu0 %v2268
          %2439 = vmatprep.subr.bf16.mxu0 0
          %2440 = vmatpush1.bf16.msra.mxu0 %v2269
          %2441 = vmatprep.subr.bf16.mxu0 0
          %2442 = vmatpush1.bf16.msra.mxu0 %v2270
          %2443 = vmatprep.subr.bf16.mxu0 0
          %2444 = vmatpush1.bf16.msra.mxu0 %v2271
          %2445 = vmatprep.subr.bf16.mxu0 0
          %2446 = vmatpush1.bf16.msra.mxu0 %v2272
          %2447 = vmatprep.subr.bf16.mxu0 0
          %2448 = vmatpush1.bf16.msra.mxu0 %v2273
          %2449 = vmatprep.subr.bf16.mxu0 0
          %2450 = vmatpush1.bf16.msra.mxu0 %v2274
          %2451 = vmatprep.mubr.bf16.mxu0 %v1769
          %2452 = vmatmul.mubr.bf16.gmra.mrb[0].mxu0 %v1768
          %v2453 = vpop.f32.mrb[0].mxu0
          %v2454 = vadd.f32 %v1938, %v2453
          %v2455 = vpop.f32.mrb[0].mxu0
          %v2456 = vpop.f32.mrb[0].mxu0
          %v2457 = vpop.f32.mrb[0].mxu0
          %2458 = vdwg.mxu0
          %2459 = vmatprep.subr.bf16.mxu0 0
          %2460 = vmatpush1.bf16.msra.mxu0 %v2275
          %2461 = vmatprep.subr.bf16.mxu0 0
          %2462 = vmatpush1.bf16.msra.mxu0 %v2276
          %2463 = vmatprep.subr.bf16.mxu0 0
          %2464 = vmatpush1.bf16.msra.mxu0 %v2277
          %2465 = vmatprep.subr.bf16.mxu0 0
          %2466 = vmatpush1.bf16.msra.mxu0 %v2278
          %2467 = vmatprep.subr.bf16.mxu0 0
          %2468 = vmatpush1.bf16.msra.mxu0 %v2279
          %2469 = vmatprep.subr.bf16.mxu0 0
          %2470 = vmatpush1.bf16.msra.mxu0 %v2280
          %2471 = vmatprep.subr.bf16.mxu0 0
          %2472 = vmatpush1.bf16.msra.mxu0 %v2281
          %2473 = vmatprep.subr.bf16.mxu0 0
          %2474 = vmatpush1.bf16.msra.mxu0 %v2282
          %2475 = vmatprep.subr.bf16.mxu0 0
          %2476 = vmatpush1.bf16.msra.mxu0 %v2283
          %2477 = vmatprep.subr.bf16.mxu0 0
          %2478 = vmatpush1.bf16.msra.mxu0 %v2284
          %2479 = vmatprep.subr.bf16.mxu0 0
          %2480 = vmatpush1.bf16.msra.mxu0 %v2285
          %2481 = vmatprep.subr.bf16.mxu0 0
          %2482 = vmatpush1.bf16.msra.mxu0 %v2286
          %2483 = vmatprep.subr.bf16.mxu0 0
          %2484 = vmatpush1.bf16.msra.mxu0 %v2287
          %2485 = vmatprep.subr.bf16.mxu0 0
          %2486 = vmatpush1.bf16.msra.mxu0 %v2288
          %2487 = vmatprep.subr.bf16.mxu0 0
          %2488 = vmatpush1.bf16.msra.mxu0 %v2289
          %2489 = vmatprep.subr.bf16.mxu0 0
          %2490 = vmatpush1.bf16.msra.mxu0 %v2290
          %2491 = vmatprep.mubr.bf16.mxu0 %v1771
          %2492 = vmatmul.mubr.bf16.gmra.mrb[0].mxu0 %v1770
          %v2493 = vpop.f32.mrb[0].mxu0
          %v2494 = vadd.f32 %v2454, %v2493
          %v2495 = vpop.f32.mrb[0].mxu0
          %v2496 = vpop.f32.mrb[0].mxu0
          %v2497 = vpop.f32.mrb[0].mxu0
          %2498 = vdwg.mxu0
          %2499 = vmatprep.subr.bf16.mxu0 0
          %2500 = vmatpush1.bf16.msra.mxu0 %v2291
          %2501 = vmatprep.subr.bf16.mxu0 0
          %2502 = vmatpush1.bf16.msra.mxu0 %v2292
          %2503 = vmatprep.subr.bf16.mxu0 0
          %2504 = vmatpush1.bf16.msra.mxu0 %v2293
          %2505 = vmatprep.subr.bf16.mxu0 0
          %2506 = vmatpush1.bf16.msra.mxu0 %v2294
          %2507 = vmatprep.subr.bf16.mxu0 0
          %2508 = vmatpush1.bf16.msra.mxu0 %v2295
          %2509 = vmatprep.subr.bf16.mxu0 0
          %2510 = vmatpush1.bf16.msra.mxu0 %v2296
          %2511 = vmatprep.subr.bf16.mxu0 0
          %2512 = vmatpush1.bf16.msra.mxu0 %v2297
          %2513 = vmatprep.subr.bf16.mxu0 0
          %2514 = vmatpush1.bf16.msra.mxu0 %v2298
          %2515 = vmatprep.subr.bf16.mxu0 0
          %2516 = vmatpush1.bf16.msra.mxu0 %v2299
          %2517 = vmatprep.subr.bf16.mxu0 0
          %2518 = vmatpush1.bf16.msra.mxu0 %v2300
          %2519 = vmatprep.subr.bf16.mxu0 0
          %2520 = vmatpush1.bf16.msra.mxu0 %v2301
          %2521 = vmatprep.subr.bf16.mxu0 0
          %2522 = vmatpush1.bf16.msra.mxu0 %v2302
          %2523 = vmatprep.subr.bf16.mxu0 0
          %2524 = vmatpush1.bf16.msra.mxu0 %v2303
          %2525 = vmatprep.subr.bf16.mxu0 0
          %2526 = vmatpush1.bf16.msra.mxu0 %v2304
          %2527 = vmatprep.subr.bf16.mxu0 0
          %2528 = vmatpush1.bf16.msra.mxu0 %v2305
          %2529 = vmatprep.subr.bf16.mxu0 0
          %2530 = vmatpush1.bf16.msra.mxu0 %v2306
          %2531 = vmatprep.mubr.bf16.mxu0 %v1773
          %2532 = vmatmul.mubr.bf16.gmra.mrb[0].mxu0 %v1772
          %v2533 = vpop.f32.mrb[0].mxu0
          %v2534 = vadd.f32 %v2494, %v2533
          %v2535 = vpop.f32.mrb[0].mxu0
          %v2536 = vpop.f32.mrb[0].mxu0
          %v2537 = vpop.f32.mrb[0].mxu0
          %2538 = vdwg.mxu0
          %2539 = vmatprep.subr.bf16.mxu0 0
          %2540 = vmatpush1.bf16.msra.mxu0 %v2307
          %2541 = vmatprep.subr.bf16.mxu0 0
          %2542 = vmatpush1.bf16.msra.mxu0 %v2308
          %2543 = vmatprep.subr.bf16.mxu0 0
          %2544 = vmatpush1.bf16.msra.mxu0 %v2309
          %2545 = vmatprep.subr.bf16.mxu0 0
          %2546 = vmatpush1.bf16.msra.mxu0 %v2310
          %2547 = vmatprep.subr.bf16.mxu0 0
          %2548 = vmatpush1.bf16.msra.mxu0 %v2311
          %2549 = vmatprep.subr.bf16.mxu0 0
          %2550 = vmatpush1.bf16.msra.mxu0 %v2312
          %2551 = vmatprep.subr.bf16.mxu0 0
          %2552 = vmatpush1.bf16.msra.mxu0 %v2313
          %2553 = vmatprep.subr.bf16.mxu0 0
          %2554 = vmatpush1.bf16.msra.mxu0 %v2314
          %2555 = vmatprep.subr.bf16.mxu0 0
          %2556 = vmatpush1.bf16.msra.mxu0 %v2315
          %2557 = vmatprep.subr.bf16.mxu0 0
          %2558 = vmatpush1.bf16.msra.mxu0 %v2316
          %2559 = vmatprep.subr.bf16.mxu0 0
          %2560 = vmatpush1.bf16.msra.mxu0 %v2317
          %2561 = vmatprep.subr.bf16.mxu0 0
          %2562 = vmatpush1.bf16.msra.mxu0 %v2318
          %2563 = vmatprep.subr.bf16.mxu0 0
          %2564 = vmatpush1.bf16.msra.mxu0 %v2319
          %2565 = vmatprep.subr.bf16.mxu0 0
          %2566 = vmatpush1.bf16.msra.mxu0 %v2320
          %2567 = vmatprep.subr.bf16.mxu0 0
          %2568 = vmatpush1.bf16.msra.mxu0 %v2321
          %2569 = vmatprep.subr.bf16.mxu0 0
          %2570 = vmatpush1.bf16.msra.mxu0 %v2322
          %2571 = vmatprep.mubr.bf16.mxu0 %v1775
          %2572 = vmatmul.mubr.bf16.gmra.mrb[0].mxu0 %v1774
          %v2573 = vpop.f32.mrb[0].mxu0
          %v2574 = vadd.f32 %v2534, %v2573
          %v2575 = vpop.f32.mrb[0].mxu0
          %v2576 = vpop.f32.mrb[0].mxu0
          %v2577 = vpop.f32.mrb[0].mxu0
          %2578 = vdwg.mxu0
          %2579 = vmatprep.subr.bf16.mxu0 0
          %2580 = vmatpush1.bf16.msra.mxu0 %v2323
          %2581 = vmatprep.subr.bf16.mxu0 0
          %2582 = vmatpush1.bf16.msra.mxu0 %v2324
          %2583 = vmatprep.subr.bf16.mxu0 0
          %2584 = vmatpush1.bf16.msra.mxu0 %v2325
          %2585 = vmatprep.subr.bf16.mxu0 0
          %2586 = vmatpush1.bf16.msra.mxu0 %v2326
          %2587 = vmatprep.subr.bf16.mxu0 0
          %2588 = vmatpush1.bf16.msra.mxu0 %v2327
          %2589 = vmatprep.subr.bf16.mxu0 0
          %2590 = vmatpush1.bf16.msra.mxu0 %v2328
          %2591 = vmatprep.subr.bf16.mxu0 0
          %2592 = vmatpush1.bf16.msra.mxu0 %v2329
          %2593 = vmatprep.subr.bf16.mxu0 0
          %2594 = vmatpush1.bf16.msra.mxu0 %v2330
          %2595 = vmatprep.subr.bf16.mxu0 0
          %2596 = vmatpush1.bf16.msra.mxu0 %v2331
          %2597 = vmatprep.subr.bf16.mxu0 0
          %2598 = vmatpush1.bf16.msra.mxu0 %v2332
          %2599 = vmatprep.subr.bf16.mxu0 0
          %2600 = vmatpush1.bf16.msra.mxu0 %v2333
          %2601 = vmatprep.subr.bf16.mxu0 0
          %2602 = vmatpush1.bf16.msra.mxu0 %v2334
          %2603 = vmatprep.subr.bf16.mxu0 0
          %2604 = vmatpush1.bf16.msra.mxu0 %v2335
          %2605 = vmatprep.subr.bf16.mxu0 0
          %2606 = vmatpush1.bf16.msra.mxu0 %v2336
          %2607 = vmatprep.subr.bf16.mxu0 0
          %2608 = vmatpush1.bf16.msra.mxu0 %v2337
          %2609 = vmatprep.subr.bf16.mxu0 0
          %2610 = vmatpush1.bf16.msra.mxu0 %v2338
          %2611 = vmatprep.mubr.bf16.mxu0 %v1777
          %2612 = vmatmul.mubr.bf16.gmra.mrb[0].mxu0 %v1776
          %v2613 = vpop.f32.mrb[0].mxu0
          %v2614 = vadd.f32 %v2574, %v2613
          %v2615 = vpop.f32.mrb[0].mxu0
          %v2616 = vpop.f32.mrb[0].mxu0
          %v2617 = vpop.f32.mrb[0].mxu0
          %2618 = vdwg.mxu0
          %2619 = vst [vmem:[%s323] sm:$0x1] %v2614
        $region64: #{tpu_custom_call.1} parent=47 // pred_fallthru
          _
        %s2620 = sand.u32 %s197, 1
        %s2621 = scalar_lea.sflag [#allocation5], %s2620
        %s2622 = sand.u32 %s197, 1
        %s2623 = scalar_lea.vmem [#allocation8], %s2622
        // Predicated region
        $region65: #{tpu_custom_call.1} parent=47 // pred_check
          %p2624 = pneg %p207
        $region66: #{tpu_custom_call.1} parent=47 // pred_check_branch
          %2626 = sbr.rel (%p2624) target = $region68
        $region67: #{tpu_custom_call.1} parent=47 // pred_region
          %s2628 = ssub.s32 16, 16
          %2629 = vsyncadd %s2621, %s2628
          %s2630 = smul.addr %s27, 16
          %s2631 = scalar_lea.hbm %s7, %s2630
          %s2633 = sshll.u32 %s2623, 4
          %s2634 = int_to_ptr.vmem [resolvable:$true] %s2633
          %2636 = dma.vmem_to_hbm [thread:$0]  %s2634, 16, %s2631, %s2621
        $region68: #{tpu_custom_call.1} parent=47 // pred_fallthru
          _
      $region48: #{tpu_custom_call.1} parent=5 // pred_fallthru
        _
      %p2637 = scmp.le.s32.totalorder 2, %s18
      // Predicated region
      $region69: #{tpu_custom_call.1} parent=5 // pred_check
        %p2638 = pneg %p2637
      $region70: #{tpu_custom_call.1} parent=5 // pred_check_branch
        %2640 = sbr.rel (%p2638) target = $region72
      $region71: #{tpu_custom_call.1} parent=5 // pred_region
        %s2641 = ssub.s32 %s18, 2
        // Predicated region
        $region73: #{tpu_custom_call.1} parent=71 // pred_check
          %p2642 = pneg %p213
        $region74: #{tpu_custom_call.1} parent=71 // pred_check_branch
          %2644 = sbr.rel (%p2642) target = $region76
        $region75: #{tpu_custom_call.1} parent=71 // pred_region
          %s2645 = sand.u32 %s198, 1
          %s2646 = scalar_lea.sflag [#allocation5], %s2645
          %s2647 = sand.u32 %s198, 1
          %s2648 = scalar_lea.vmem [#allocation8], %s2647
          %2649 = dma.done %s2646, 16
        $region76: #{tpu_custom_call.1} parent=71 // pred_fallthru
          _
      $region72: #{tpu_custom_call.1} parent=5 // pred_fallthru
        _
    $region6: #{tpu_custom_call.1} parent=1 // loop_footer
      %s22 = sadd.s32 1, %s18
    $region7: #{tpu_custom_call.1} parent=1 // loop_footer_branch
      %17 = sbr.rel target = $region3
    $region8: #{tpu_custom_call.1} parent=1 // loop_exit
      _
    %2650 = vsyncpa [#allocation4], 1
    %s2651 = scalar_lea.sflag [#allocation4], 1
    %2652 = vsyncpa %s2651, 1
    %2653 = vsyncpa [#allocation7], 1
    %2654 = vsyncpa [#allocation5], 1
    %s2655 = scalar_lea.sflag [#allocation5], 1
    %2656 = vsyncpa %s2655, 1

</llo_original>
